<compile_context>
chip_gen: v7x
topology: tpu7x:2x2x1
jax: 0.10.0
libtpu: 0.0.40
codegen_flags: <defaults>
</compile_context>

<pallas_src>
import jax
import jax.numpy as jnp
from jax.experimental import pallas as pl
from jax.experimental.pallas import tpu as pltpu

HIDDEN_SIZE = 64
INPUT_SIZE = 15
NUM_CLASSES = 15
NUM_LAYERS = 2        # two explicit layers in the kernel
FC_OUT_PAD = 128      # lane-dense padded output width (>= NUM_CLASSES)


def _lstm_kernel(gx0_ref,    # (T, Bp, 4H)  precomputed x@W_ih0 + b0, time-major
                 whh0_ref,   # (H, 4H)      layer-0 recurrent weights
                 w1_ref,     # (2H, 4H)     fused layer-1 weights [W_ih1; W_hh1]
                 b1_ref,     # (1, 4H)      layer-1 combined bias
                 fcw_ref,    # (H, 128)     fc weight, zero-padded lanes
                 fcb_ref,    # (1, 128)     fc bias,  zero-padded lanes
                 out_ref):   # (Bp, 128)
    T, Bp, G = gx0_ref.shape
    H = whh0_ref.shape[0]

    # Load weights once; hoist the bias broadcast out of the recurrence
    # (JAX does not CSE broadcast_in_dim).
    whh0 = whh0_ref[...]
    w1 = w1_ref[...]
    b1 = jnp.broadcast_to(b1_ref[...], (Bp, G))

    def activations(gates):
        # gate column order is [i, f, o, g]: one 3H-wide sigmoid + one H tanh
        ifo = jax.nn.sigmoid(gates[:, :3 * H])
        g = jnp.tanh(gates[:, 3 * H:])
        return ifo[:, :H], ifo[:, H:2 * H], ifo[:, 2 * H:3 * H], g

    def step(t, carry):
        h0, c0, h1, c1 = carry
        # layer 0: input projection is precomputed -> only the recurrent matmul
        g0 = gx0_ref[t] + jnp.dot(h0, whh0, preferred_element_type=jnp.float32)
        i0, f0, o0, gg0 = activations(g0)
        c0 = f0 * c0 + i0 * gg0
        h0 = o0 * jnp.tanh(c0)
        # layer 1: single fused K=2H matmul on [h0_t, h1_{t-1}]
        g1 = jnp.dot(jnp.concatenate([h0, h1], axis=-1), w1,
                     preferred_element_type=jnp.float32) + b1
        i1, f1, o1, gg1 = activations(g1)
        c1 = f1 * c1 + i1 * gg1
        h1 = o1 * jnp.tanh(c1)
        return h0, c0, h1, c1

    zeros = jnp.zeros((Bp, H), jnp.float32)
    _, _, h1, _ = jax.lax.fori_loop(0, T, step, (zeros, zeros, zeros, zeros),
                                    unroll=True)

    # final Linear on the last timestep's layer-1 hidden state (lane-dense store)
    out_ref[...] = (jnp.dot(h1, fcw_ref[...], preferred_element_type=jnp.float32)
                    + fcb_ref[...])


@jax.jit
def rnn_forward(x, kparams):
    """x: (B, T, I) float32 (PyTorch batch_first layout). Returns (B, C)."""
    wih0, whh0, b0, w1, b1, fcw, fcb = kparams
    B, T, I = x.shape
    if T < 1:
        raise ValueError("sequence length must be >= 1")
    H = HIDDEN_SIZE

    # pad batch to a full sublane group
    Bp = max(8, -(-B // 8) * 8)
    x_p = jnp.pad(x.astype(jnp.float32), ((0, Bp - B), (0, 0), (0, 0)))

    # Layer-0 input projection for all timesteps (no sequential dependence):
    # one batched matmul + bias, produced directly in time-major layout so each
    # timestep is a contiguous (Bp, 4H) slab inside the kernel.
    gx0 = jnp.einsum("bti,ih->tbh", x_p, wih0,
                     preferred_element_type=jnp.float32) + b0   # (T, Bp, 4H)

    out_p = pl.pallas_call(
        _lstm_kernel,
        out_shape=jax.ShapeDtypeStruct((Bp, FC_OUT_PAD), jnp.float32),
        in_specs=[pl.BlockSpec(memory_space=pltpu.MemorySpace.VMEM)] * 6,
        out_specs=pl.BlockSpec(memory_space=pltpu.MemorySpace.VMEM),
    )(gx0, whh0, w1, b1, fcw, fcb)

    return out_p[:B, :NUM_CLASSES]


def _reorder_gates(w):
    """PyTorch gate order [i, f, g, o] (rows) -> kernel order [i, f, o, g]."""
    H = HIDDEN_SIZE
    return jnp.concatenate([w[:2 * H], w[3 * H:4 * H], w[2 * H:3 * H]], axis=0)


def init_params(key):
    """Deterministic synthetic parameters with PyTorch-native shapes/layout."""
    H, I, C = HIDDEN_SIZE, INPUT_SIZE, NUM_CLASSES
    bound = 1.0 / jnp.sqrt(jnp.float32(H))
    ks = jax.random.split(key, 10)
    u = lambda k, shape: jax.random.uniform(k, shape, jnp.float32, -bound, bound)
    return (u(ks[0], (4 * H, I)),   # weight_ih_l0
            u(ks[1], (4 * H, H)),   # weight_hh_l0
            u(ks[2], (4 * H,)),     # bias_ih_l0
            u(ks[3], (4 * H,)),     # bias_hh_l0
            u(ks[4], (4 * H, H)),   # weight_ih_l1
            u(ks[5], (4 * H, H)),   # weight_hh_l1
            u(ks[6], (4 * H,)),     # bias_ih_l1
            u(ks[7], (4 * H,)),     # bias_hh_l1
            u(ks[8], (C, H)),       # fc.weight
            u(ks[9], (C,)))         # fc.bias


def prepare_params(tparams):
    """Convert PyTorch-layout params to the kernel layout:
    gate reorder [i,f,o,g], transpose to [in, out], fuse layer-1 weights,
    combine biases, zero-pad the fc output to 128 lanes."""
    (w_ih0, w_hh0, b_ih0, b_hh0,
     w_ih1, w_hh1, b_ih1, b_hh1, fc_w, fc_b) = tparams
    H, C = HIDDEN_SIZE, NUM_CLASSES
    r = _reorder_gates
    wih0 = r(w_ih0).T                                            # (I, 4H)
    whh0 = r(w_hh0).T                                            # (H, 4H)
    b0 = (r(b_ih0) + r(b_hh0))[None, :]                          # (1, 4H)
    w1 = jnp.concatenate([r(w_ih1).T, r(w_hh1).T], axis=0)       # (2H, 4H)
    b1 = (r(b_ih1) + r(b_hh1))[None, :]                          # (1, 4H)
    fcw = jnp.zeros((H, FC_OUT_PAD), jnp.float32).at[:, :C].set(fc_w.T)
    fcb = jnp.zeros((1, FC_OUT_PAD), jnp.float32).at[:, :C].set(fc_b[None, :])
    return (wih0, whh0, b0, w1, b1, fcw, fcb)


def rnn_reference(x, tparams):
    """Pure-JAX reference with PyTorch-native layout/gate order."""
    (w_ih0, w_hh0, b_ih0, b_hh0,
     w_ih1, w_hh1, b_ih1, b_hh1, fc_w, fc_b) = tparams
    B, T, _ = x.shape
    H = HIDDEN_SIZE
    h0 = c0 = h1 = c1 = jnp.zeros((B, H), jnp.float32)

    def cell(x_in, h, c, w_ih, w_hh, b_ih, b_hh):
        g = x_in @ w_ih.T + h @ w_hh.T + b_ih + b_hh
        i = jax.nn.sigmoid(g[:, 0:H])
        f = jax.nn.sigmoid(g[:, H:2 * H])
        gg = jnp.tanh(g[:, 2 * H:3 * H])
        o = jax.nn.sigmoid(g[:, 3 * H:4 * H])
        c_new = f * c + i * gg
        return o * jnp.tanh(c_new), c_new

    for t in range(T):
        h0, c0 = cell(x[:, t, :], h0, c0, w_ih0, w_hh0, b_ih0, b_hh0)
        h1, c1 = cell(h0, h1, c1, w_ih1, w_hh1, b_ih1, b_hh1)
    return h1 @ fc_w.T + fc_b


if __name__ == "__main__":
    key = jax.random.PRNGKey(0)
    k_param, k_x = jax.random.split(key)

    B, T = 2, 8
    x = jax.random.normal(k_x, (B, T, INPUT_SIZE), jnp.float32)

    tparams = init_params(k_param)
    kparams = prepare_params(tparams)

    out = rnn_forward(x, kparams)
    out = jax.block_until_ready(out)

    ref = rnn_reference(x, tparams)
    assert out.shape == (B, NUM_CLASSES)
    assert jnp.allclose(out, ref, atol=1e-4, rtol=1e-4), "mismatch vs JAX reference"

    print("KERNEL_OK")
</pallas_src>

<mosaic_0001>
module attributes {stable_mosaic.version = 11 : i64} {
  func.func @_lstm_kernel(%arg0: memref<8x8x256xf32, #tpu.memory_space<vmem>>, %arg1: memref<64x256xf32, #tpu.memory_space<vmem>>, %arg2: memref<128x256xf32, #tpu.memory_space<vmem>>, %arg3: memref<1x256xf32, #tpu.memory_space<vmem>>, %arg4: memref<64x128xf32, #tpu.memory_space<vmem>>, %arg5: memref<1x128xf32, #tpu.memory_space<vmem>>, %arg6: memref<8x128xf32, #tpu.memory_space<vmem>>) attributes {dimension_semantics = [], scalar_prefetch = 0 : i64, scratch_operands = 0 : i64, tpu.core_type = #tpu.core_type<tc>} {
    %c0 = arith.constant 0 : index
    %c0_0 = arith.constant 0 : index
    %0 = vector.load %arg1[%c0, %c0_0] : memref<64x256xf32, #tpu.memory_space<vmem>>, vector<64x256xf32>
    %c0_1 = arith.constant 0 : index
    %c0_2 = arith.constant 0 : index
    %1 = vector.load %arg2[%c0_1, %c0_2] : memref<128x256xf32, #tpu.memory_space<vmem>>, vector<128x256xf32>
    %c0_3 = arith.constant 0 : index
    %c0_4 = arith.constant 0 : index
    %2 = vector.load %arg3[%c0_3, %c0_4] : memref<1x256xf32, #tpu.memory_space<vmem>>, vector<1x256xf32>
    %3 = vector.shape_cast %2 : vector<1x256xf32> to vector<1x256xf32>
    %4 = vector.broadcast %3 : vector<1x256xf32> to vector<8x256xf32>
    %cst = arith.constant 0.000000e+00 : f32
    %5 = vector.broadcast %cst : f32 to vector<8x64xf32>
    %c0_i32 = arith.constant 0 : i32
    %6 = arith.index_cast %c0_i32 : i32 to index
    %c0_5 = arith.constant 0 : index
    %c0_6 = arith.constant 0 : index
    %7 = vector.load %arg0[%6, %c0_5, %c0_6] : memref<8x8x256xf32, #tpu.memory_space<vmem>>, vector<1x8x256xf32>
    %8 = vector.shape_cast %7 : vector<1x8x256xf32> to vector<8x256xf32>
    %cst_7 = arith.constant dense<0.000000e+00> : vector<8x256xf32>
    %9 = tpu.matmul %5, %0, %cst_7 {dimension_numbers = #tpu.dot_dimension_numbers<[1], [0], [0], [1], [0, 0, 1, 1], [], []>} : vector<8x64xf32>, vector<64x256xf32>, vector<8x256xf32> -> vector<8x256xf32>
    %10 = arith.addf %8, %9 : vector<8x256xf32>
    %11 = vector.extract_strided_slice %10 {offsets = [0, 0], sizes = [8, 192], strides = [1, 1]} : vector<8x256xf32> to vector<8x192xf32>
    %12 = arith.negf %11 : vector<8x192xf32>
    %13 = math.exp %12 : vector<8x192xf32>
    %cst_8 = arith.constant 1.000000e+00 : f32
    %14 = vector.broadcast %cst_8 : f32 to vector<8x192xf32>
    %15 = arith.addf %14, %13 : vector<8x192xf32>
    %16 = arith.divf %14, %15 : vector<8x192xf32>
    %17 = vector.extract_strided_slice %10 {offsets = [0, 192], sizes = [8, 64], strides = [1, 1]} : vector<8x256xf32> to vector<8x64xf32>
    %18 = math.tanh %17 : vector<8x64xf32>
    %19 = vector.extract_strided_slice %16 {offsets = [0, 0], sizes = [8, 64], strides = [1, 1]} : vector<8x192xf32> to vector<8x64xf32>
    %20 = vector.extract_strided_slice %16 {offsets = [0, 64], sizes = [8, 64], strides = [1, 1]} : vector<8x192xf32> to vector<8x64xf32>
    %21 = vector.extract_strided_slice %16 {offsets = [0, 128], sizes = [8, 64], strides = [1, 1]} : vector<8x192xf32> to vector<8x64xf32>
    %22 = arith.mulf %20, %5 : vector<8x64xf32>
    %23 = arith.mulf %19, %18 : vector<8x64xf32>
    %24 = arith.addf %22, %23 : vector<8x64xf32>
    %25 = math.tanh %24 : vector<8x64xf32>
    %26 = arith.mulf %21, %25 : vector<8x64xf32>
    %27 = tpu.concatenate %26, %5 in 1 : vector<8x64xf32>, vector<8x64xf32> -> vector<8x128xf32>
    %cst_9 = arith.constant dense<0.000000e+00> : vector<8x256xf32>
    %28 = tpu.matmul %27, %1, %cst_9 {dimension_numbers = #tpu.dot_dimension_numbers<[1], [0], [0], [1], [0, 0, 1, 1], [], []>} : vector<8x128xf32>, vector<128x256xf32>, vector<8x256xf32> -> vector<8x256xf32>
    %29 = arith.addf %28, %4 : vector<8x256xf32>
    %30 = vector.extract_strided_slice %29 {offsets = [0, 0], sizes = [8, 192], strides = [1, 1]} : vector<8x256xf32> to vector<8x192xf32>
    %31 = arith.negf %30 : vector<8x192xf32>
    %32 = math.exp %31 : vector<8x192xf32>
    %cst_10 = arith.constant 1.000000e+00 : f32
    %33 = vector.broadcast %cst_10 : f32 to vector<8x192xf32>
    %34 = arith.addf %33, %32 : vector<8x192xf32>
    %35 = arith.divf %33, %34 : vector<8x192xf32>
    %36 = vector.extract_strided_slice %29 {offsets = [0, 192], sizes = [8, 64], strides = [1, 1]} : vector<8x256xf32> to vector<8x64xf32>
    %37 = math.tanh %36 : vector<8x64xf32>
    %38 = vector.extract_strided_slice %35 {offsets = [0, 0], sizes = [8, 64], strides = [1, 1]} : vector<8x192xf32> to vector<8x64xf32>
    %39 = vector.extract_strided_slice %35 {offsets = [0, 64], sizes = [8, 64], strides = [1, 1]} : vector<8x192xf32> to vector<8x64xf32>
    %40 = vector.extract_strided_slice %35 {offsets = [0, 128], sizes = [8, 64], strides = [1, 1]} : vector<8x192xf32> to vector<8x64xf32>
    %41 = arith.mulf %39, %5 : vector<8x64xf32>
    %42 = arith.mulf %38, %37 : vector<8x64xf32>
    %43 = arith.addf %41, %42 : vector<8x64xf32>
    %44 = math.tanh %43 : vector<8x64xf32>
    %45 = arith.mulf %40, %44 : vector<8x64xf32>
    %c1_i32 = arith.constant 1 : i32
    %46 = arith.index_cast %c1_i32 : i32 to index
    %c0_11 = arith.constant 0 : index
    %c0_12 = arith.constant 0 : index
    %47 = vector.load %arg0[%46, %c0_11, %c0_12] : memref<8x8x256xf32, #tpu.memory_space<vmem>>, vector<1x8x256xf32>
    %48 = vector.shape_cast %47 : vector<1x8x256xf32> to vector<8x256xf32>
    %cst_13 = arith.constant dense<0.000000e+00> : vector<8x256xf32>
    %49 = tpu.matmul %26, %0, %cst_13 {dimension_numbers = #tpu.dot_dimension_numbers<[1], [0], [0], [1], [0, 0, 1, 1], [], []>} : vector<8x64xf32>, vector<64x256xf32>, vector<8x256xf32> -> vector<8x256xf32>
    %50 = arith.addf %48, %49 : vector<8x256xf32>
    %51 = vector.extract_strided_slice %50 {offsets = [0, 0], sizes = [8, 192], strides = [1, 1]} : vector<8x256xf32> to vector<8x192xf32>
    %52 = arith.negf %51 : vector<8x192xf32>
    %53 = math.exp %52 : vector<8x192xf32>
    %cst_14 = arith.constant 1.000000e+00 : f32
    %54 = vector.broadcast %cst_14 : f32 to vector<8x192xf32>
    %55 = arith.addf %54, %53 : vector<8x192xf32>
    %56 = arith.divf %54, %55 : vector<8x192xf32>
    %57 = vector.extract_strided_slice %50 {offsets = [0, 192], sizes = [8, 64], strides = [1, 1]} : vector<8x256xf32> to vector<8x64xf32>
    %58 = math.tanh %57 : vector<8x64xf32>
    %59 = vector.extract_strided_slice %56 {offsets = [0, 0], sizes = [8, 64], strides = [1, 1]} : vector<8x192xf32> to vector<8x64xf32>
    %60 = vector.extract_strided_slice %56 {offsets = [0, 64], sizes = [8, 64], strides = [1, 1]} : vector<8x192xf32> to vector<8x64xf32>
    %61 = vector.extract_strided_slice %56 {offsets = [0, 128], sizes = [8, 64], strides = [1, 1]} : vector<8x192xf32> to vector<8x64xf32>
    %62 = arith.mulf %60, %24 : vector<8x64xf32>
    %63 = arith.mulf %59, %58 : vector<8x64xf32>
    %64 = arith.addf %62, %63 : vector<8x64xf32>
    %65 = math.tanh %64 : vector<8x64xf32>
    %66 = arith.mulf %61, %65 : vector<8x64xf32>
    %67 = tpu.concatenate %66, %45 in 1 : vector<8x64xf32>, vector<8x64xf32> -> vector<8x128xf32>
    %cst_15 = arith.constant dense<0.000000e+00> : vector<8x256xf32>
    %68 = tpu.matmul %67, %1, %cst_15 {dimension_numbers = #tpu.dot_dimension_numbers<[1], [0], [0], [1], [0, 0, 1, 1], [], []>} : vector<8x128xf32>, vector<128x256xf32>, vector<8x256xf32> -> vector<8x256xf32>
    %69 = arith.addf %68, %4 : vector<8x256xf32>
    %70 = vector.extract_strided_slice %69 {offsets = [0, 0], sizes = [8, 192], strides = [1, 1]} : vector<8x256xf32> to vector<8x192xf32>
    %71 = arith.negf %70 : vector<8x192xf32>
    %72 = math.exp %71 : vector<8x192xf32>
    %cst_16 = arith.constant 1.000000e+00 : f32
    %73 = vector.broadcast %cst_16 : f32 to vector<8x192xf32>
    %74 = arith.addf %73, %72 : vector<8x192xf32>
    %75 = arith.divf %73, %74 : vector<8x192xf32>
    %76 = vector.extract_strided_slice %69 {offsets = [0, 192], sizes = [8, 64], strides = [1, 1]} : vector<8x256xf32> to vector<8x64xf32>
    %77 = math.tanh %76 : vector<8x64xf32>
    %78 = vector.extract_strided_slice %75 {offsets = [0, 0], sizes = [8, 64], strides = [1, 1]} : vector<8x192xf32> to vector<8x64xf32>
    %79 = vector.extract_strided_slice %75 {offsets = [0, 64], sizes = [8, 64], strides = [1, 1]} : vector<8x192xf32> to vector<8x64xf32>
    %80 = vector.extract_strided_slice %75 {offsets = [0, 128], sizes = [8, 64], strides = [1, 1]} : vector<8x192xf32> to vector<8x64xf32>
    %81 = arith.mulf %79, %43 : vector<8x64xf32>
    %82 = arith.mulf %78, %77 : vector<8x64xf32>
    %83 = arith.addf %81, %82 : vector<8x64xf32>
    %84 = math.tanh %83 : vector<8x64xf32>
    %85 = arith.mulf %80, %84 : vector<8x64xf32>
    %c2_i32 = arith.constant 2 : i32
    %86 = arith.index_cast %c2_i32 : i32 to index
    %c0_17 = arith.constant 0 : index
    %c0_18 = arith.constant 0 : index
    %87 = vector.load %arg0[%86, %c0_17, %c0_18] : memref<8x8x256xf32, #tpu.memory_space<vmem>>, vector<1x8x256xf32>
    %88 = vector.shape_cast %87 : vector<1x8x256xf32> to vector<8x256xf32>
    %cst_19 = arith.constant dense<0.000000e+00> : vector<8x256xf32>
    %89 = tpu.matmul %66, %0, %cst_19 {dimension_numbers = #tpu.dot_dimension_numbers<[1], [0], [0], [1], [0, 0, 1, 1], [], []>} : vector<8x64xf32>, vector<64x256xf32>, vector<8x256xf32> -> vector<8x256xf32>
    %90 = arith.addf %88, %89 : vector<8x256xf32>
    %91 = vector.extract_strided_slice %90 {offsets = [0, 0], sizes = [8, 192], strides = [1, 1]} : vector<8x256xf32> to vector<8x192xf32>
    %92 = arith.negf %91 : vector<8x192xf32>
    %93 = math.exp %92 : vector<8x192xf32>
    %cst_20 = arith.constant 1.000000e+00 : f32
    %94 = vector.broadcast %cst_20 : f32 to vector<8x192xf32>
    %95 = arith.addf %94, %93 : vector<8x192xf32>
    %96 = arith.divf %94, %95 : vector<8x192xf32>
    %97 = vector.extract_strided_slice %90 {offsets = [0, 192], sizes = [8, 64], strides = [1, 1]} : vector<8x256xf32> to vector<8x64xf32>
    %98 = math.tanh %97 : vector<8x64xf32>
    %99 = vector.extract_strided_slice %96 {offsets = [0, 0], sizes = [8, 64], strides = [1, 1]} : vector<8x192xf32> to vector<8x64xf32>
    %100 = vector.extract_strided_slice %96 {offsets = [0, 64], sizes = [8, 64], strides = [1, 1]} : vector<8x192xf32> to vector<8x64xf32>
    %101 = vector.extract_strided_slice %96 {offsets = [0, 128], sizes = [8, 64], strides = [1, 1]} : vector<8x192xf32> to vector<8x64xf32>
    %102 = arith.mulf %100, %64 : vector<8x64xf32>
    %103 = arith.mulf %99, %98 : vector<8x64xf32>
    %104 = arith.addf %102, %103 : vector<8x64xf32>
    %105 = math.tanh %104 : vector<8x64xf32>
    %106 = arith.mulf %101, %105 : vector<8x64xf32>
    %107 = tpu.concatenate %106, %85 in 1 : vector<8x64xf32>, vector<8x64xf32> -> vector<8x128xf32>
    %cst_21 = arith.constant dense<0.000000e+00> : vector<8x256xf32>
    %108 = tpu.matmul %107, %1, %cst_21 {dimension_numbers = #tpu.dot_dimension_numbers<[1], [0], [0], [1], [0, 0, 1, 1], [], []>} : vector<8x128xf32>, vector<128x256xf32>, vector<8x256xf32> -> vector<8x256xf32>
    %109 = arith.addf %108, %4 : vector<8x256xf32>
    %110 = vector.extract_strided_slice %109 {offsets = [0, 0], sizes = [8, 192], strides = [1, 1]} : vector<8x256xf32> to vector<8x192xf32>
    %111 = arith.negf %110 : vector<8x192xf32>
    %112 = math.exp %111 : vector<8x192xf32>
    %cst_22 = arith.constant 1.000000e+00 : f32
    %113 = vector.broadcast %cst_22 : f32 to vector<8x192xf32>
    %114 = arith.addf %113, %112 : vector<8x192xf32>
    %115 = arith.divf %113, %114 : vector<8x192xf32>
    %116 = vector.extract_strided_slice %109 {offsets = [0, 192], sizes = [8, 64], strides = [1, 1]} : vector<8x256xf32> to vector<8x64xf32>
    %117 = math.tanh %116 : vector<8x64xf32>
    %118 = vector.extract_strided_slice %115 {offsets = [0, 0], sizes = [8, 64], strides = [1, 1]} : vector<8x192xf32> to vector<8x64xf32>
    %119 = vector.extract_strided_slice %115 {offsets = [0, 64], sizes = [8, 64], strides = [1, 1]} : vector<8x192xf32> to vector<8x64xf32>
    %120 = vector.extract_strided_slice %115 {offsets = [0, 128], sizes = [8, 64], strides = [1, 1]} : vector<8x192xf32> to vector<8x64xf32>
    %121 = arith.mulf %119, %83 : vector<8x64xf32>
    %122 = arith.mulf %118, %117 : vector<8x64xf32>
    %123 = arith.addf %121, %122 : vector<8x64xf32>
    %124 = math.tanh %123 : vector<8x64xf32>
    %125 = arith.mulf %120, %124 : vector<8x64xf32>
    %c3_i32 = arith.constant 3 : i32
    %126 = arith.index_cast %c3_i32 : i32 to index
    %c0_23 = arith.constant 0 : index
    %c0_24 = arith.constant 0 : index
    %127 = vector.load %arg0[%126, %c0_23, %c0_24] : memref<8x8x256xf32, #tpu.memory_space<vmem>>, vector<1x8x256xf32>
    %128 = vector.shape_cast %127 : vector<1x8x256xf32> to vector<8x256xf32>
    %cst_25 = arith.constant dense<0.000000e+00> : vector<8x256xf32>
    %129 = tpu.matmul %106, %0, %cst_25 {dimension_numbers = #tpu.dot_dimension_numbers<[1], [0], [0], [1], [0, 0, 1, 1], [], []>} : vector<8x64xf32>, vector<64x256xf32>, vector<8x256xf32> -> vector<8x256xf32>
    %130 = arith.addf %128, %129 : vector<8x256xf32>
    %131 = vector.extract_strided_slice %130 {offsets = [0, 0], sizes = [8, 192], strides = [1, 1]} : vector<8x256xf32> to vector<8x192xf32>
    %132 = arith.negf %131 : vector<8x192xf32>
    %133 = math.exp %132 : vector<8x192xf32>
    %cst_26 = arith.constant 1.000000e+00 : f32
    %134 = vector.broadcast %cst_26 : f32 to vector<8x192xf32>
    %135 = arith.addf %134, %133 : vector<8x192xf32>
    %136 = arith.divf %134, %135 : vector<8x192xf32>
    %137 = vector.extract_strided_slice %130 {offsets = [0, 192], sizes = [8, 64], strides = [1, 1]} : vector<8x256xf32> to vector<8x64xf32>
    %138 = math.tanh %137 : vector<8x64xf32>
    %139 = vector.extract_strided_slice %136 {offsets = [0, 0], sizes = [8, 64], strides = [1, 1]} : vector<8x192xf32> to vector<8x64xf32>
    %140 = vector.extract_strided_slice %136 {offsets = [0, 64], sizes = [8, 64], strides = [1, 1]} : vector<8x192xf32> to vector<8x64xf32>
    %141 = vector.extract_strided_slice %136 {offsets = [0, 128], sizes = [8, 64], strides = [1, 1]} : vector<8x192xf32> to vector<8x64xf32>
    %142 = arith.mulf %140, %104 : vector<8x64xf32>
    %143 = arith.mulf %139, %138 : vector<8x64xf32>
    %144 = arith.addf %142, %143 : vector<8x64xf32>
    %145 = math.tanh %144 : vector<8x64xf32>
    %146 = arith.mulf %141, %145 : vector<8x64xf32>
    %147 = tpu.concatenate %146, %125 in 1 : vector<8x64xf32>, vector<8x64xf32> -> vector<8x128xf32>
    %cst_27 = arith.constant dense<0.000000e+00> : vector<8x256xf32>
    %148 = tpu.matmul %147, %1, %cst_27 {dimension_numbers = #tpu.dot_dimension_numbers<[1], [0], [0], [1], [0, 0, 1, 1], [], []>} : vector<8x128xf32>, vector<128x256xf32>, vector<8x256xf32> -> vector<8x256xf32>
    %149 = arith.addf %148, %4 : vector<8x256xf32>
    %150 = vector.extract_strided_slice %149 {offsets = [0, 0], sizes = [8, 192], strides = [1, 1]} : vector<8x256xf32> to vector<8x192xf32>
    %151 = arith.negf %150 : vector<8x192xf32>
    %152 = math.exp %151 : vector<8x192xf32>
    %cst_28 = arith.constant 1.000000e+00 : f32
    %153 = vector.broadcast %cst_28 : f32 to vector<8x192xf32>
    %154 = arith.addf %153, %152 : vector<8x192xf32>
    %155 = arith.divf %153, %154 : vector<8x192xf32>
    %156 = vector.extract_strided_slice %149 {offsets = [0, 192], sizes = [8, 64], strides = [1, 1]} : vector<8x256xf32> to vector<8x64xf32>
    %157 = math.tanh %156 : vector<8x64xf32>
    %158 = vector.extract_strided_slice %155 {offsets = [0, 0], sizes = [8, 64], strides = [1, 1]} : vector<8x192xf32> to vector<8x64xf32>
    %159 = vector.extract_strided_slice %155 {offsets = [0, 64], sizes = [8, 64], strides = [1, 1]} : vector<8x192xf32> to vector<8x64xf32>
    %160 = vector.extract_strided_slice %155 {offsets = [0, 128], sizes = [8, 64], strides = [1, 1]} : vector<8x192xf32> to vector<8x64xf32>
    %161 = arith.mulf %159, %123 : vector<8x64xf32>
    %162 = arith.mulf %158, %157 : vector<8x64xf32>
    %163 = arith.addf %161, %162 : vector<8x64xf32>
    %164 = math.tanh %163 : vector<8x64xf32>
    %165 = arith.mulf %160, %164 : vector<8x64xf32>
    %c4_i32 = arith.constant 4 : i32
    %166 = arith.index_cast %c4_i32 : i32 to index
    %c0_29 = arith.constant 0 : index
    %c0_30 = arith.constant 0 : index
    %167 = vector.load %arg0[%166, %c0_29, %c0_30] : memref<8x8x256xf32, #tpu.memory_space<vmem>>, vector<1x8x256xf32>
    %168 = vector.shape_cast %167 : vector<1x8x256xf32> to vector<8x256xf32>
    %cst_31 = arith.constant dense<0.000000e+00> : vector<8x256xf32>
    %169 = tpu.matmul %146, %0, %cst_31 {dimension_numbers = #tpu.dot_dimension_numbers<[1], [0], [0], [1], [0, 0, 1, 1], [], []>} : vector<8x64xf32>, vector<64x256xf32>, vector<8x256xf32> -> vector<8x256xf32>
    %170 = arith.addf %168, %169 : vector<8x256xf32>
    %171 = vector.extract_strided_slice %170 {offsets = [0, 0], sizes = [8, 192], strides = [1, 1]} : vector<8x256xf32> to vector<8x192xf32>
    %172 = arith.negf %171 : vector<8x192xf32>
    %173 = math.exp %172 : vector<8x192xf32>
    %cst_32 = arith.constant 1.000000e+00 : f32
    %174 = vector.broadcast %cst_32 : f32 to vector<8x192xf32>
    %175 = arith.addf %174, %173 : vector<8x192xf32>
    %176 = arith.divf %174, %175 : vector<8x192xf32>
    %177 = vector.extract_strided_slice %170 {offsets = [0, 192], sizes = [8, 64], strides = [1, 1]} : vector<8x256xf32> to vector<8x64xf32>
    %178 = math.tanh %177 : vector<8x64xf32>
    %179 = vector.extract_strided_slice %176 {offsets = [0, 0], sizes = [8, 64], strides = [1, 1]} : vector<8x192xf32> to vector<8x64xf32>
    %180 = vector.extract_strided_slice %176 {offsets = [0, 64], sizes = [8, 64], strides = [1, 1]} : vector<8x192xf32> to vector<8x64xf32>
    %181 = vector.extract_strided_slice %176 {offsets = [0, 128], sizes = [8, 64], strides = [1, 1]} : vector<8x192xf32> to vector<8x64xf32>
    %182 = arith.mulf %180, %144 : vector<8x64xf32>
    %183 = arith.mulf %179, %178 : vector<8x64xf32>
    %184 = arith.addf %182, %183 : vector<8x64xf32>
    %185 = math.tanh %184 : vector<8x64xf32>
    %186 = arith.mulf %181, %185 : vector<8x64xf32>
    %187 = tpu.concatenate %186, %165 in 1 : vector<8x64xf32>, vector<8x64xf32> -> vector<8x128xf32>
    %cst_33 = arith.constant dense<0.000000e+00> : vector<8x256xf32>
    %188 = tpu.matmul %187, %1, %cst_33 {dimension_numbers = #tpu.dot_dimension_numbers<[1], [0], [0], [1], [0, 0, 1, 1], [], []>} : vector<8x128xf32>, vector<128x256xf32>, vector<8x256xf32> -> vector<8x256xf32>
    %189 = arith.addf %188, %4 : vector<8x256xf32>
    %190 = vector.extract_strided_slice %189 {offsets = [0, 0], sizes = [8, 192], strides = [1, 1]} : vector<8x256xf32> to vector<8x192xf32>
    %191 = arith.negf %190 : vector<8x192xf32>
    %192 = math.exp %191 : vector<8x192xf32>
    %cst_34 = arith.constant 1.000000e+00 : f32
    %193 = vector.broadcast %cst_34 : f32 to vector<8x192xf32>
    %194 = arith.addf %193, %192 : vector<8x192xf32>
    %195 = arith.divf %193, %194 : vector<8x192xf32>
    %196 = vector.extract_strided_slice %189 {offsets = [0, 192], sizes = [8, 64], strides = [1, 1]} : vector<8x256xf32> to vector<8x64xf32>
    %197 = math.tanh %196 : vector<8x64xf32>
    %198 = vector.extract_strided_slice %195 {offsets = [0, 0], sizes = [8, 64], strides = [1, 1]} : vector<8x192xf32> to vector<8x64xf32>
    %199 = vector.extract_strided_slice %195 {offsets = [0, 64], sizes = [8, 64], strides = [1, 1]} : vector<8x192xf32> to vector<8x64xf32>
    %200 = vector.extract_strided_slice %195 {offsets = [0, 128], sizes = [8, 64], strides = [1, 1]} : vector<8x192xf32> to vector<8x64xf32>
    %201 = arith.mulf %199, %163 : vector<8x64xf32>
    %202 = arith.mulf %198, %197 : vector<8x64xf32>
    %203 = arith.addf %201, %202 : vector<8x64xf32>
    %204 = math.tanh %203 : vector<8x64xf32>
    %205 = arith.mulf %200, %204 : vector<8x64xf32>
    %c5_i32 = arith.constant 5 : i32
    %206 = arith.index_cast %c5_i32 : i32 to index
    %c0_35 = arith.constant 0 : index
    %c0_36 = arith.constant 0 : index
    %207 = vector.load %arg0[%206, %c0_35, %c0_36] : memref<8x8x256xf32, #tpu.memory_space<vmem>>, vector<1x8x256xf32>
    %208 = vector.shape_cast %207 : vector<1x8x256xf32> to vector<8x256xf32>
    %cst_37 = arith.constant dense<0.000000e+00> : vector<8x256xf32>
    %209 = tpu.matmul %186, %0, %cst_37 {dimension_numbers = #tpu.dot_dimension_numbers<[1], [0], [0], [1], [0, 0, 1, 1], [], []>} : vector<8x64xf32>, vector<64x256xf32>, vector<8x256xf32> -> vector<8x256xf32>
    %210 = arith.addf %208, %209 : vector<8x256xf32>
    %211 = vector.extract_strided_slice %210 {offsets = [0, 0], sizes = [8, 192], strides = [1, 1]} : vector<8x256xf32> to vector<8x192xf32>
    %212 = arith.negf %211 : vector<8x192xf32>
    %213 = math.exp %212 : vector<8x192xf32>
    %cst_38 = arith.constant 1.000000e+00 : f32
    %214 = vector.broadcast %cst_38 : f32 to vector<8x192xf32>
    %215 = arith.addf %214, %213 : vector<8x192xf32>
    %216 = arith.divf %214, %215 : vector<8x192xf32>
    %217 = vector.extract_strided_slice %210 {offsets = [0, 192], sizes = [8, 64], strides = [1, 1]} : vector<8x256xf32> to vector<8x64xf32>
    %218 = math.tanh %217 : vector<8x64xf32>
    %219 = vector.extract_strided_slice %216 {offsets = [0, 0], sizes = [8, 64], strides = [1, 1]} : vector<8x192xf32> to vector<8x64xf32>
    %220 = vector.extract_strided_slice %216 {offsets = [0, 64], sizes = [8, 64], strides = [1, 1]} : vector<8x192xf32> to vector<8x64xf32>
    %221 = vector.extract_strided_slice %216 {offsets = [0, 128], sizes = [8, 64], strides = [1, 1]} : vector<8x192xf32> to vector<8x64xf32>
    %222 = arith.mulf %220, %184 : vector<8x64xf32>
    %223 = arith.mulf %219, %218 : vector<8x64xf32>
    %224 = arith.addf %222, %223 : vector<8x64xf32>
    %225 = math.tanh %224 : vector<8x64xf32>
    %226 = arith.mulf %221, %225 : vector<8x64xf32>
    %227 = tpu.concatenate %226, %205 in 1 : vector<8x64xf32>, vector<8x64xf32> -> vector<8x128xf32>
    %cst_39 = arith.constant dense<0.000000e+00> : vector<8x256xf32>
    %228 = tpu.matmul %227, %1, %cst_39 {dimension_numbers = #tpu.dot_dimension_numbers<[1], [0], [0], [1], [0, 0, 1, 1], [], []>} : vector<8x128xf32>, vector<128x256xf32>, vector<8x256xf32> -> vector<8x256xf32>
    %229 = arith.addf %228, %4 : vector<8x256xf32>
    %230 = vector.extract_strided_slice %229 {offsets = [0, 0], sizes = [8, 192], strides = [1, 1]} : vector<8x256xf32> to vector<8x192xf32>
    %231 = arith.negf %230 : vector<8x192xf32>
    %232 = math.exp %231 : vector<8x192xf32>
    %cst_40 = arith.constant 1.000000e+00 : f32
    %233 = vector.broadcast %cst_40 : f32 to vector<8x192xf32>
    %234 = arith.addf %233, %232 : vector<8x192xf32>
    %235 = arith.divf %233, %234 : vector<8x192xf32>
    %236 = vector.extract_strided_slice %229 {offsets = [0, 192], sizes = [8, 64], strides = [1, 1]} : vector<8x256xf32> to vector<8x64xf32>
    %237 = math.tanh %236 : vector<8x64xf32>
    %238 = vector.extract_strided_slice %235 {offsets = [0, 0], sizes = [8, 64], strides = [1, 1]} : vector<8x192xf32> to vector<8x64xf32>
    %239 = vector.extract_strided_slice %235 {offsets = [0, 64], sizes = [8, 64], strides = [1, 1]} : vector<8x192xf32> to vector<8x64xf32>
    %240 = vector.extract_strided_slice %235 {offsets = [0, 128], sizes = [8, 64], strides = [1, 1]} : vector<8x192xf32> to vector<8x64xf32>
    %241 = arith.mulf %239, %203 : vector<8x64xf32>
    %242 = arith.mulf %238, %237 : vector<8x64xf32>
    %243 = arith.addf %241, %242 : vector<8x64xf32>
    %244 = math.tanh %243 : vector<8x64xf32>
    %245 = arith.mulf %240, %244 : vector<8x64xf32>
    %c6_i32 = arith.constant 6 : i32
    %246 = arith.index_cast %c6_i32 : i32 to index
    %c0_41 = arith.constant 0 : index
    %c0_42 = arith.constant 0 : index
    %247 = vector.load %arg0[%246, %c0_41, %c0_42] : memref<8x8x256xf32, #tpu.memory_space<vmem>>, vector<1x8x256xf32>
    %248 = vector.shape_cast %247 : vector<1x8x256xf32> to vector<8x256xf32>
    %cst_43 = arith.constant dense<0.000000e+00> : vector<8x256xf32>
    %249 = tpu.matmul %226, %0, %cst_43 {dimension_numbers = #tpu.dot_dimension_numbers<[1], [0], [0], [1], [0, 0, 1, 1], [], []>} : vector<8x64xf32>, vector<64x256xf32>, vector<8x256xf32> -> vector<8x256xf32>
    %250 = arith.addf %248, %249 : vector<8x256xf32>
    %251 = vector.extract_strided_slice %250 {offsets = [0, 0], sizes = [8, 192], strides = [1, 1]} : vector<8x256xf32> to vector<8x192xf32>
    %252 = arith.negf %251 : vector<8x192xf32>
    %253 = math.exp %252 : vector<8x192xf32>
    %cst_44 = arith.constant 1.000000e+00 : f32
    %254 = vector.broadcast %cst_44 : f32 to vector<8x192xf32>
    %255 = arith.addf %254, %253 : vector<8x192xf32>
    %256 = arith.divf %254, %255 : vector<8x192xf32>
    %257 = vector.extract_strided_slice %250 {offsets = [0, 192], sizes = [8, 64], strides = [1, 1]} : vector<8x256xf32> to vector<8x64xf32>
    %258 = math.tanh %257 : vector<8x64xf32>
    %259 = vector.extract_strided_slice %256 {offsets = [0, 0], sizes = [8, 64], strides = [1, 1]} : vector<8x192xf32> to vector<8x64xf32>
    %260 = vector.extract_strided_slice %256 {offsets = [0, 64], sizes = [8, 64], strides = [1, 1]} : vector<8x192xf32> to vector<8x64xf32>
    %261 = vector.extract_strided_slice %256 {offsets = [0, 128], sizes = [8, 64], strides = [1, 1]} : vector<8x192xf32> to vector<8x64xf32>
    %262 = arith.mulf %260, %224 : vector<8x64xf32>
    %263 = arith.mulf %259, %258 : vector<8x64xf32>
    %264 = arith.addf %262, %263 : vector<8x64xf32>
    %265 = math.tanh %264 : vector<8x64xf32>
    %266 = arith.mulf %261, %265 : vector<8x64xf32>
    %267 = tpu.concatenate %266, %245 in 1 : vector<8x64xf32>, vector<8x64xf32> -> vector<8x128xf32>
    %cst_45 = arith.constant dense<0.000000e+00> : vector<8x256xf32>
    %268 = tpu.matmul %267, %1, %cst_45 {dimension_numbers = #tpu.dot_dimension_numbers<[1], [0], [0], [1], [0, 0, 1, 1], [], []>} : vector<8x128xf32>, vector<128x256xf32>, vector<8x256xf32> -> vector<8x256xf32>
    %269 = arith.addf %268, %4 : vector<8x256xf32>
    %270 = vector.extract_strided_slice %269 {offsets = [0, 0], sizes = [8, 192], strides = [1, 1]} : vector<8x256xf32> to vector<8x192xf32>
    %271 = arith.negf %270 : vector<8x192xf32>
    %272 = math.exp %271 : vector<8x192xf32>
    %cst_46 = arith.constant 1.000000e+00 : f32
    %273 = vector.broadcast %cst_46 : f32 to vector<8x192xf32>
    %274 = arith.addf %273, %272 : vector<8x192xf32>
    %275 = arith.divf %273, %274 : vector<8x192xf32>
    %276 = vector.extract_strided_slice %269 {offsets = [0, 192], sizes = [8, 64], strides = [1, 1]} : vector<8x256xf32> to vector<8x64xf32>
    %277 = math.tanh %276 : vector<8x64xf32>
    %278 = vector.extract_strided_slice %275 {offsets = [0, 0], sizes = [8, 64], strides = [1, 1]} : vector<8x192xf32> to vector<8x64xf32>
    %279 = vector.extract_strided_slice %275 {offsets = [0, 64], sizes = [8, 64], strides = [1, 1]} : vector<8x192xf32> to vector<8x64xf32>
    %280 = vector.extract_strided_slice %275 {offsets = [0, 128], sizes = [8, 64], strides = [1, 1]} : vector<8x192xf32> to vector<8x64xf32>
    %281 = arith.mulf %279, %243 : vector<8x64xf32>
    %282 = arith.mulf %278, %277 : vector<8x64xf32>
    %283 = arith.addf %281, %282 : vector<8x64xf32>
    %284 = math.tanh %283 : vector<8x64xf32>
    %285 = arith.mulf %280, %284 : vector<8x64xf32>
    %c7_i32 = arith.constant 7 : i32
    %286 = arith.index_cast %c7_i32 : i32 to index
    %c0_47 = arith.constant 0 : index
    %c0_48 = arith.constant 0 : index
    %287 = vector.load %arg0[%286, %c0_47, %c0_48] : memref<8x8x256xf32, #tpu.memory_space<vmem>>, vector<1x8x256xf32>
    %288 = vector.shape_cast %287 : vector<1x8x256xf32> to vector<8x256xf32>
    %cst_49 = arith.constant dense<0.000000e+00> : vector<8x256xf32>
    %289 = tpu.matmul %266, %0, %cst_49 {dimension_numbers = #tpu.dot_dimension_numbers<[1], [0], [0], [1], [0, 0, 1, 1], [], []>} : vector<8x64xf32>, vector<64x256xf32>, vector<8x256xf32> -> vector<8x256xf32>
    %290 = arith.addf %288, %289 : vector<8x256xf32>
    %291 = vector.extract_strided_slice %290 {offsets = [0, 0], sizes = [8, 192], strides = [1, 1]} : vector<8x256xf32> to vector<8x192xf32>
    %292 = arith.negf %291 : vector<8x192xf32>
    %293 = math.exp %292 : vector<8x192xf32>
    %cst_50 = arith.constant 1.000000e+00 : f32
    %294 = vector.broadcast %cst_50 : f32 to vector<8x192xf32>
    %295 = arith.addf %294, %293 : vector<8x192xf32>
    %296 = arith.divf %294, %295 : vector<8x192xf32>
    %297 = vector.extract_strided_slice %290 {offsets = [0, 192], sizes = [8, 64], strides = [1, 1]} : vector<8x256xf32> to vector<8x64xf32>
    %298 = math.tanh %297 : vector<8x64xf32>
    %299 = vector.extract_strided_slice %296 {offsets = [0, 0], sizes = [8, 64], strides = [1, 1]} : vector<8x192xf32> to vector<8x64xf32>
    %300 = vector.extract_strided_slice %296 {offsets = [0, 64], sizes = [8, 64], strides = [1, 1]} : vector<8x192xf32> to vector<8x64xf32>
    %301 = vector.extract_strided_slice %296 {offsets = [0, 128], sizes = [8, 64], strides = [1, 1]} : vector<8x192xf32> to vector<8x64xf32>
    %302 = arith.mulf %300, %264 : vector<8x64xf32>
    %303 = arith.mulf %299, %298 : vector<8x64xf32>
    %304 = arith.addf %302, %303 : vector<8x64xf32>
    %305 = math.tanh %304 : vector<8x64xf32>
    %306 = arith.mulf %301, %305 : vector<8x64xf32>
    %307 = tpu.concatenate %306, %285 in 1 : vector<8x64xf32>, vector<8x64xf32> -> vector<8x128xf32>
    %cst_51 = arith.constant dense<0.000000e+00> : vector<8x256xf32>
    %308 = tpu.matmul %307, %1, %cst_51 {dimension_numbers = #tpu.dot_dimension_numbers<[1], [0], [0], [1], [0, 0, 1, 1], [], []>} : vector<8x128xf32>, vector<128x256xf32>, vector<8x256xf32> -> vector<8x256xf32>
    %309 = arith.addf %308, %4 : vector<8x256xf32>
    %310 = vector.extract_strided_slice %309 {offsets = [0, 0], sizes = [8, 192], strides = [1, 1]} : vector<8x256xf32> to vector<8x192xf32>
    %311 = arith.negf %310 : vector<8x192xf32>
    %312 = math.exp %311 : vector<8x192xf32>
    %cst_52 = arith.constant 1.000000e+00 : f32
    %313 = vector.broadcast %cst_52 : f32 to vector<8x192xf32>
    %314 = arith.addf %313, %312 : vector<8x192xf32>
    %315 = arith.divf %313, %314 : vector<8x192xf32>
    %316 = vector.extract_strided_slice %309 {offsets = [0, 192], sizes = [8, 64], strides = [1, 1]} : vector<8x256xf32> to vector<8x64xf32>
    %317 = math.tanh %316 : vector<8x64xf32>
    %318 = vector.extract_strided_slice %315 {offsets = [0, 0], sizes = [8, 64], strides = [1, 1]} : vector<8x192xf32> to vector<8x64xf32>
    %319 = vector.extract_strided_slice %315 {offsets = [0, 64], sizes = [8, 64], strides = [1, 1]} : vector<8x192xf32> to vector<8x64xf32>
    %320 = vector.extract_strided_slice %315 {offsets = [0, 128], sizes = [8, 64], strides = [1, 1]} : vector<8x192xf32> to vector<8x64xf32>
    %321 = arith.mulf %319, %283 : vector<8x64xf32>
    %322 = arith.mulf %318, %317 : vector<8x64xf32>
    %323 = arith.addf %321, %322 : vector<8x64xf32>
    %324 = math.tanh %323 : vector<8x64xf32>
    %325 = arith.mulf %320, %324 : vector<8x64xf32>
    %c8_i32 = arith.constant 8 : i32
    %c0_53 = arith.constant 0 : index
    %c0_54 = arith.constant 0 : index
    %326 = vector.load %arg4[%c0_53, %c0_54] : memref<64x128xf32, #tpu.memory_space<vmem>>, vector<64x128xf32>
    %cst_55 = arith.constant dense<0.000000e+00> : vector<8x128xf32>
    %327 = tpu.matmul %325, %326, %cst_55 {dimension_numbers = #tpu.dot_dimension_numbers<[1], [0], [0], [1], [0, 0, 1, 1], [], []>} : vector<8x64xf32>, vector<64x128xf32>, vector<8x128xf32> -> vector<8x128xf32>
    %c0_56 = arith.constant 0 : index
    %c0_57 = arith.constant 0 : index
    %328 = vector.load %arg5[%c0_56, %c0_57] : memref<1x128xf32, #tpu.memory_space<vmem>>, vector<1x128xf32>
    %329 = vector.broadcast %328 : vector<1x128xf32> to vector<8x128xf32>
    %330 = arith.addf %327, %329 : vector<8x128xf32>
    %c0_58 = arith.constant 0 : index
    %c0_59 = arith.constant 0 : index
    %331 = vector.load %arg6[%c0_58, %c0_59] : memref<8x128xf32, #tpu.memory_space<vmem>>, vector<8x128xf32>
    tpu.vector_store %arg6[%c0_58, %c0_59], %330 {strides = array<i32>} : memref<8x128xf32, #tpu.memory_space<vmem>>, vector<8x128xf32>,
    return
  }
}

</mosaic_0001>

<llo_original>
// kernel: rnn_forward.1
$region0: #{rnn_forward.1}
  #allocation0 [shape = 'u32[]', space=smem, size = 0x4, offset = 0x4, fixed_abs, tag = 'smem constant byte address 0x4 - core index']
  #allocation1 [shape = 'u32[144,128]{1,0:T(1,128)}', space=vmem, size = 0x12000, scoped, tag = 'internal scratch']
  %s0 = inlined_call_operand.vmem [shape: f32[8,8,256], index: 0, kind: input, shape index: {}]
  %s1 = inlined_call_operand.vmem [shape: f32[64,256], index: 1, kind: input, shape index: {}]
  %s2 = inlined_call_operand.hbm [shape: f32[128,256], index: 2, kind: input, shape index: {}]
  %s3 = inlined_call_operand.vmem [shape: f32[1,256], index: 3, kind: input, shape index: {}]
  %s4 = inlined_call_operand.vmem [shape: f32[64,128], index: 4, kind: input, shape index: {}]
  %s5 = inlined_call_operand.vmem [shape: f32[1,128], index: 5, kind: input, shape index: {}]
  %s6 = inlined_call_operand.vmem [shape: f32[8,128], index: 6, kind: output, shape index: {}]
  %s7 = sld [smem:[#allocation0]]
  $region38: #{rnn_forward.1} parent=0
    _
  %s9 = ssub.s32 1, %s7
  %s10 = scalar_select 0, %s9, %s7
  $region1: #{rnn_forward.1} parent=0
    #allocation2 [shape = 'u8[131072]{0}', space=vmem, size = 0x20000, scoped, tag = 'input window, operand 2, single buffered']
    #allocation3 [shape = 's32[1]{0}', space=sflag, size = 0x4, scoped, tag = 'scoped memory for rnn_forward.1']
    %11 = vsyncpa [#allocation3], 0
    // Predicated region
    $region2: #{rnn_forward.1} parent=1 // pred_check
      _
    $region3: #{rnn_forward.1} parent=1 // pred_check_branch
      %13 = sbr.rel (0) target = $region5
    $region4: #{rnn_forward.1} parent=1 // pred_region
      _
    $region5: #{rnn_forward.1} parent=1 // pred_fallthru
      _
    // Predicated region
    $region6: #{rnn_forward.1} parent=1 // pred_check
      _
    $region7: #{rnn_forward.1} parent=1 // pred_check_branch
      %15 = sbr.rel (0) target = $region9
    $region8: #{rnn_forward.1} parent=1 // pred_region
      _
    $region9: #{rnn_forward.1} parent=1 // pred_fallthru
      _
    // Predicated region
    $region10: #{rnn_forward.1} parent=1 // pred_check
      _
    $region11: #{rnn_forward.1} parent=1 // pred_check_branch
      %17 = sbr.rel (0) target = $region13
    $region12: #{rnn_forward.1} parent=1 // pred_region
      %s19 = ssub.s32 4096, 4096
      %20 = vsyncadd [#allocation3], %s19
      %s21 = sshll.u32 [#allocation2], 4
      %s22 = int_to_ptr.vmem [resolvable:$true] %s21
      %27 = dma.hbm_to_vmem [thread:$0]  %s2, 4096, %s22, [#allocation3], 256, 256, 16
    $region13: #{rnn_forward.1} parent=1 // pred_fallthru
      _
    // Predicated region
    $region14: #{rnn_forward.1} parent=1 // pred_check
      _
    $region15: #{rnn_forward.1} parent=1 // pred_check_branch
      %29 = sbr.rel (0) target = $region17
    $region16: #{rnn_forward.1} parent=1 // pred_region
      _
    $region17: #{rnn_forward.1} parent=1 // pred_fallthru
      _
    // Predicated region
    $region18: #{rnn_forward.1} parent=1 // pred_check
      _
    $region19: #{rnn_forward.1} parent=1 // pred_check_branch
      %31 = sbr.rel (0) target = $region21
    $region20: #{rnn_forward.1} parent=1 // pred_region
      _
    $region21: #{rnn_forward.1} parent=1 // pred_fallthru
      _
    // Predicated region
    $region22: #{rnn_forward.1} parent=1 // pred_check
      _
    $region23: #{rnn_forward.1} parent=1 // pred_check_branch
      %33 = sbr.rel (0) target = $region25
    $region24: #{rnn_forward.1} parent=1 // pred_region
      _
    $region25: #{rnn_forward.1} parent=1 // pred_fallthru
      _
    // Predicated region
    $region26: #{rnn_forward.1} parent=1 // pred_check
      _
    $region27: #{rnn_forward.1} parent=1 // pred_check_branch
      %35 = sbr.rel (0) target = $region29
    $region28: #{rnn_forward.1} parent=1 // pred_region
      %36 = dma.done [#allocation3], 4096
    $region29: #{rnn_forward.1} parent=1 // pred_fallthru
      _
    %v37 = vld [vmem:[%s1] sm:$0xff]
    %v38 = vld [vmem:[%s1 + $0x8] sm:$0xff]
    %v39 = vld [vmem:[%s1 + $0x10] sm:$0xff]
    %v40 = vld [vmem:[%s1 + $0x18] sm:$0xff]
    %v41 = vld [vmem:[%s1 + $0x20] sm:$0xff]
    %v42 = vld [vmem:[%s1 + $0x28] sm:$0xff]
    %v43 = vld [vmem:[%s1 + $0x30] sm:$0xff]
    %v44 = vld [vmem:[%s1 + $0x38] sm:$0xff]
    %v45 = vld [vmem:[%s1 + $0x40] sm:$0xff]
    %v46 = vld [vmem:[%s1 + $0x48] sm:$0xff]
    %v47 = vld [vmem:[%s1 + $0x50] sm:$0xff]
    %v48 = vld [vmem:[%s1 + $0x58] sm:$0xff]
    %v49 = vld [vmem:[%s1 + $0x60] sm:$0xff]
    %v50 = vld [vmem:[%s1 + $0x68] sm:$0xff]
    %v51 = vld [vmem:[%s1 + $0x70] sm:$0xff]
    %v52 = vld [vmem:[%s1 + $0x78] sm:$0xff]
    %v53 = vld [vmem:[#allocation2] sm:$0xff]
    %v54 = vld [vmem:[#allocation2 + $0x8] sm:$0xff]
    %v55 = vld [vmem:[#allocation2 + $0x10] sm:$0xff]
    %v56 = vld [vmem:[#allocation2 + $0x18] sm:$0xff]
    %v57 = vld [vmem:[#allocation2 + $0x20] sm:$0xff]
    %v58 = vld [vmem:[#allocation2 + $0x28] sm:$0xff]
    %v59 = vld [vmem:[#allocation2 + $0x30] sm:$0xff]
    %v60 = vld [vmem:[#allocation2 + $0x38] sm:$0xff]
    %v61 = vld [vmem:[#allocation2 + $0x40] sm:$0xff]
    %v62 = vld [vmem:[#allocation2 + $0x48] sm:$0xff]
    %v63 = vld [vmem:[#allocation2 + $0x50] sm:$0xff]
    %v64 = vld [vmem:[#allocation2 + $0x58] sm:$0xff]
    %v65 = vld [vmem:[#allocation2 + $0x60] sm:$0xff]
    %v66 = vld [vmem:[#allocation2 + $0x68] sm:$0xff]
    %v67 = vld [vmem:[#allocation2 + $0x70] sm:$0xff]
    %v68 = vld [vmem:[#allocation2 + $0x78] sm:$0xff]
    %v69 = vld [vmem:[#allocation2 + $0x80] sm:$0xff]
    %v70 = vld [vmem:[#allocation2 + $0x88] sm:$0xff]
    %v71 = vld [vmem:[#allocation2 + $0x90] sm:$0xff]
    %v72 = vld [vmem:[#allocation2 + $0x98] sm:$0xff]
    %v73 = vld [vmem:[#allocation2 + $0xa0] sm:$0xff]
    %v74 = vld [vmem:[#allocation2 + $0xa8] sm:$0xff]
    %v75 = vld [vmem:[#allocation2 + $0xb0] sm:$0xff]
    %v76 = vld [vmem:[#allocation2 + $0xb8] sm:$0xff]
    %v77 = vld [vmem:[#allocation2 + $0xc0] sm:$0xff]
    %v78 = vld [vmem:[#allocation2 + $0xc8] sm:$0xff]
    %v79 = vld [vmem:[#allocation2 + $0xd0] sm:$0xff]
    %v80 = vld [vmem:[#allocation2 + $0xd8] sm:$0xff]
    %v81 = vld [vmem:[#allocation2 + $0xe0] sm:$0xff]
    %v82 = vld [vmem:[#allocation2 + $0xe8] sm:$0xff]
    %v83 = vld [vmem:[#allocation2 + $0xf0] sm:$0xff]
    %v84 = vld [vmem:[#allocation2 + $0xf8] sm:$0xff]
    %v85 = vld [vmem:[%s3] sm:$0x3]
    %v87 = vlaneseq
    %v88 = vshrl.u32 %v87, 7
    %v89 = vsub.s32 0, %v88
    %v90 = vrot.slane %v85, %v89
    %v91 = vlaneseq
    %v92 = vshrl.u32 %v91, 7
    %v93 = vsub.s32 1, %v92
    %v94 = vrot.slane %v85, %v93
    %v97 = vld [vmem:[%s0] sm:$0xff]
    %v98 = vld [vmem:[%s0 + $0x8] sm:$0xff]
    %vm99 = vcmask 523264
    %v101 = vsel %vm99, 0.0, 0
    %103 = vmatprep.subr.mxu0 %v38
    %104 = vmatpush1.msra.mxu0 %v37
    %105 = vmatprep.subr.mxu0 %v40
    %106 = vmatpush1.msra.mxu0 %v39
    %107 = vmatprep.subr.mxu0 %v42
    %108 = vmatpush1.msra.mxu0 %v41
    %109 = vmatprep.subr.mxu0 %v44
    %110 = vmatpush1.msra.mxu0 %v43
    %111 = vmatprep.subr.mxu0 %v46
    %112 = vmatpush1.msra.mxu0 %v45
    %113 = vmatprep.subr.mxu0 %v48
    %114 = vmatpush1.msra.mxu0 %v47
    %115 = vmatprep.subr.mxu0 %v50
    %116 = vmatpush1.msra.mxu0 %v49
    %117 = vmatprep.subr.mxu0 %v52
    %118 = vmatpush1.msra.mxu0 %v51
    %119 = vmatprep.subr.mxu0 0.0
    %120 = vmatpush1.msra.mxu0 0.0
    %121 = vmatprep.subr.mxu0 0.0
    %122 = vmatpush1.msra.mxu0 0.0
    %123 = vmatprep.subr.mxu0 0.0
    %124 = vmatpush1.msra.mxu0 0.0
    %125 = vmatprep.subr.mxu0 0.0
    %126 = vmatpush1.msra.mxu0 0.0
    %127 = vmatprep.subr.mxu0 0.0
    %128 = vmatpush1.msra.mxu0 0.0
    %129 = vmatprep.subr.mxu0 0.0
    %130 = vmatpush1.msra.mxu0 0.0
    %131 = vmatprep.subr.mxu0 0.0
    %132 = vmatpush1.msra.mxu0 0.0
    %133 = vmatprep.subr.mxu0 0.0
    %134 = vmatpush1.msra.mxu0 0.0
    %135 = vmatprep.subr.mxu0 0.0
    %136 = vmatpush1.msra.mxu0 0.0
    %137 = vmatprep.subr.mxu0 0.0
    %138 = vmatpush1.msra.mxu0 0.0
    %139 = vmatprep.subr.mxu0 0.0
    %140 = vmatpush1.msra.mxu0 0.0
    %141 = vmatprep.subr.mxu0 0.0
    %142 = vmatpush1.msra.mxu0 0.0
    %143 = vmatprep.subr.mxu0 0.0
    %144 = vmatpush1.msra.mxu0 0.0
    %145 = vmatprep.subr.mxu0 0.0
    %146 = vmatpush1.msra.mxu0 0.0
    %147 = vmatprep.subr.mxu0 0.0
    %148 = vmatpush1.msra.mxu0 0.0
    %149 = vmatprep.subr.mxu0 0.0
    %150 = vmatpush1.msra.mxu0 0.0
    %151 = vmatprep.subr.mxu0 0.0
    %152 = vmatpush1.msra.mxu0 0.0
    %153 = vmatprep.subr.mxu0 0.0
    %154 = vmatpush1.msra.mxu0 0.0
    %155 = vmatprep.subr.mxu0 0.0
    %156 = vmatpush1.msra.mxu0 0.0
    %157 = vmatprep.subr.mxu0 0.0
    %158 = vmatpush1.msra.mxu0 0.0
    %159 = vmatprep.subr.mxu0 0.0
    %160 = vmatpush1.msra.mxu0 0.0
    %161 = vmatprep.subr.mxu0 0.0
    %162 = vmatpush1.msra.mxu0 0.0
    %163 = vmatprep.subr.mxu0 0.0
    %164 = vmatpush1.msra.mxu0 0.0
    %165 = vmatprep.subr.mxu0 0.0
    %166 = vmatpush1.msra.mxu0 0.0
    %167 = vmatprep.mubr.f32.mxu0 0.0
    %168 = vmatmul.mubr.f32.gmra.mrb[0].mxu0 %v101
    %v169 = vpop.f32.mrb[0].mxu0
    %v170 = vadd.f32 0.0, %v169
    %v171 = vpop.f32.mrb[0].mxu0
    %v172 = vadd.f32 0.0, %v171
    %173 = vdwg.mxu0
    %v174 = vadd.f32 %v97, %v170
    %v175 = vadd.f32 %v98, %v172
    %v176 = vxor.u32 %v174, 2147483648
    %v177 = vxor.u32 %v175, 2147483648
    %v178 = vmul.f32 %v176, 1.442695
    %v179 = vpow.pop %v178
    %v180 = vmul.f32 %v177, 1.442695
    %v181 = vpow.pop %v180
    %v182 = vadd.f32 %v179, 1.0
    %v183 = vadd.f32 %v181, 1.0
    %v184 = vrcp.pop %v182
    %v185 = vmul.f32 1.0, %v184
    %v186 = vrcp.pop %v183
    %v187 = vmul.f32 1.0, %v186
    %v188 = vtanh.pop %v175
    %v189 = vmul.f32 %v185, 0.0
    %191 = vrot.lane.b32.xlu0 %v188, 64
    %v192 = vpop.permute.xlu0 %191
    %v194 = vmul.f32 %v185, %v192
    %196 = vrot.lane.b32.xlu0 %v194, 64
    %v197 = vpop.permute.xlu0 %196
    %v199 = vadd.f32 %v189, %v197
    %v200 = vtanh.pop %v199
    %202 = vrot.lane.b32.xlu0 %v200, 64
    %v203 = vpop.permute.xlu0 %202
    %v205 = vmul.f32 %v187, %v203
    %v206 = vsel %vm99, %v205, 0.0
    %207 = vmatprep.subr.mxu0 %v54
    %208 = vmatpush1.msra.mxu0 %v53
    %209 = vmatprep.subr.mxu0 %v56
    %210 = vmatpush1.msra.mxu0 %v55
    %211 = vmatprep.subr.mxu0 %v58
    %212 = vmatpush1.msra.mxu0 %v57
    %213 = vmatprep.subr.mxu0 %v60
    %214 = vmatpush1.msra.mxu0 %v59
    %215 = vmatprep.subr.mxu0 %v62
    %216 = vmatpush1.msra.mxu0 %v61
    %217 = vmatprep.subr.mxu0 %v64
    %218 = vmatpush1.msra.mxu0 %v63
    %219 = vmatprep.subr.mxu0 %v66
    %220 = vmatpush1.msra.mxu0 %v65
    %221 = vmatprep.subr.mxu0 %v68
    %222 = vmatpush1.msra.mxu0 %v67
    %223 = vmatprep.subr.mxu0 %v70
    %224 = vmatpush1.msra.mxu0 %v69
    %225 = vmatprep.subr.mxu0 %v72
    %226 = vmatpush1.msra.mxu0 %v71
    %227 = vmatprep.subr.mxu0 %v74
    %228 = vmatpush1.msra.mxu0 %v73
    %229 = vmatprep.subr.mxu0 %v76
    %230 = vmatpush1.msra.mxu0 %v75
    %231 = vmatprep.subr.mxu0 %v78
    %232 = vmatpush1.msra.mxu0 %v77
    %233 = vmatprep.subr.mxu0 %v80
    %234 = vmatpush1.msra.mxu0 %v79
    %235 = vmatprep.subr.mxu0 %v82
    %236 = vmatpush1.msra.mxu0 %v81
    %237 = vmatprep.subr.mxu0 %v84
    %238 = vmatpush1.msra.mxu0 %v83
    %239 = vmatprep.subr.mxu0 0.0
    %240 = vmatpush1.msra.mxu0 0.0
    %241 = vmatprep.subr.mxu0 0.0
    %242 = vmatpush1.msra.mxu0 0.0
    %243 = vmatprep.subr.mxu0 0.0
    %244 = vmatpush1.msra.mxu0 0.0
    %245 = vmatprep.subr.mxu0 0.0
    %246 = vmatpush1.msra.mxu0 0.0
    %247 = vmatprep.subr.mxu0 0.0
    %248 = vmatpush1.msra.mxu0 0.0
    %249 = vmatprep.subr.mxu0 0.0
    %250 = vmatpush1.msra.mxu0 0.0
    %251 = vmatprep.subr.mxu0 0.0
    %252 = vmatpush1.msra.mxu0 0.0
    %253 = vmatprep.subr.mxu0 0.0
    %254 = vmatpush1.msra.mxu0 0.0
    %255 = vmatprep.subr.mxu0 0.0
    %256 = vmatpush1.msra.mxu0 0.0
    %257 = vmatprep.subr.mxu0 0.0
    %258 = vmatpush1.msra.mxu0 0.0
    %259 = vmatprep.subr.mxu0 0.0
    %260 = vmatpush1.msra.mxu0 0.0
    %261 = vmatprep.subr.mxu0 0.0
    %262 = vmatpush1.msra.mxu0 0.0
    %263 = vmatprep.subr.mxu0 0.0
    %264 = vmatpush1.msra.mxu0 0.0
    %265 = vmatprep.subr.mxu0 0.0
    %266 = vmatpush1.msra.mxu0 0.0
    %267 = vmatprep.subr.mxu0 0.0
    %268 = vmatpush1.msra.mxu0 0.0
    %269 = vmatprep.subr.mxu0 0.0
    %270 = vmatpush1.msra.mxu0 0.0
    %271 = vmatprep.mubr.f32.mxu0 0.0
    %272 = vmatmul.mubr.f32.gmra.mrb[0].mxu0 %v206
    %v273 = vpop.f32.mrb[0].mxu0
    %v274 = vadd.f32 %v90, %v273
    %v275 = vpop.f32.mrb[0].mxu0
    %v276 = vadd.f32 %v94, %v275
    %277 = vdwg.mxu0
    %v278 = vxor.u32 %v274, 2147483648
    %v279 = vxor.u32 %v276, 2147483648
    %v280 = vmul.f32 %v278, 1.442695
    %v281 = vpow.pop %v280
    %v282 = vmul.f32 %v279, 1.442695
    %v283 = vpow.pop %v282
    %v284 = vadd.f32 %v281, 1.0
    %v285 = vadd.f32 %v283, 1.0
    %v286 = vrcp.pop %v284
    %v287 = vmul.f32 1.0, %v286
    %v288 = vrcp.pop %v285
    %v289 = vmul.f32 1.0, %v288
    %v290 = vtanh.pop %v276
    %v291 = vmul.f32 %v287, 0.0
    %293 = vrot.lane.b32.xlu0 %v290, 64
    %v294 = vpop.permute.xlu0 %293
    %v296 = vmul.f32 %v287, %v294
    %298 = vrot.lane.b32.xlu0 %v296, 64
    %v299 = vpop.permute.xlu0 %298
    %v301 = vadd.f32 %v291, %v299
    %v302 = vtanh.pop %v301
    %304 = vrot.lane.b32.xlu0 %v302, 64
    %v305 = vpop.permute.xlu0 %304
    %v307 = vmul.f32 %v289, %v305
    %s308 = scalar_lea.vmem %s0, 16
    %v309 = vld [vmem:[%s308] sm:$0xff]
    %v310 = vld [vmem:[%s308 + $0x8] sm:$0xff]
    %v312 = vsel %vm99, %v205, 0
    %314 = vmatprep.subr.mxu0 %v38
    %315 = vmatpush1.msra.mxu0 %v37
    %316 = vmatprep.subr.mxu0 %v40
    %317 = vmatpush1.msra.mxu0 %v39
    %318 = vmatprep.subr.mxu0 %v42
    %319 = vmatpush1.msra.mxu0 %v41
    %320 = vmatprep.subr.mxu0 %v44
    %321 = vmatpush1.msra.mxu0 %v43
    %322 = vmatprep.subr.mxu0 %v46
    %323 = vmatpush1.msra.mxu0 %v45
    %324 = vmatprep.subr.mxu0 %v48
    %325 = vmatpush1.msra.mxu0 %v47
    %326 = vmatprep.subr.mxu0 %v50
    %327 = vmatpush1.msra.mxu0 %v49
    %328 = vmatprep.subr.mxu0 %v52
    %329 = vmatpush1.msra.mxu0 %v51
    %330 = vmatprep.subr.mxu0 0.0
    %331 = vmatpush1.msra.mxu0 0.0
    %332 = vmatprep.subr.mxu0 0.0
    %333 = vmatpush1.msra.mxu0 0.0
    %334 = vmatprep.subr.mxu0 0.0
    %335 = vmatpush1.msra.mxu0 0.0
    %336 = vmatprep.subr.mxu0 0.0
    %337 = vmatpush1.msra.mxu0 0.0
    %338 = vmatprep.subr.mxu0 0.0
    %339 = vmatpush1.msra.mxu0 0.0
    %340 = vmatprep.subr.mxu0 0.0
    %341 = vmatpush1.msra.mxu0 0.0
    %342 = vmatprep.subr.mxu0 0.0
    %343 = vmatpush1.msra.mxu0 0.0
    %344 = vmatprep.subr.mxu0 0.0
    %345 = vmatpush1.msra.mxu0 0.0
    %346 = vmatprep.subr.mxu0 0.0
    %347 = vmatpush1.msra.mxu0 0.0
    %348 = vmatprep.subr.mxu0 0.0
    %349 = vmatpush1.msra.mxu0 0.0
    %350 = vmatprep.subr.mxu0 0.0
    %351 = vmatpush1.msra.mxu0 0.0
    %352 = vmatprep.subr.mxu0 0.0
    %353 = vmatpush1.msra.mxu0 0.0
    %354 = vmatprep.subr.mxu0 0.0
    %355 = vmatpush1.msra.mxu0 0.0
    %356 = vmatprep.subr.mxu0 0.0
    %357 = vmatpush1.msra.mxu0 0.0
    %358 = vmatprep.subr.mxu0 0.0
    %359 = vmatpush1.msra.mxu0 0.0
    %360 = vmatprep.subr.mxu0 0.0
    %361 = vmatpush1.msra.mxu0 0.0
    %362 = vmatprep.subr.mxu0 0.0
    %363 = vmatpush1.msra.mxu0 0.0
    %364 = vmatprep.subr.mxu0 0.0
    %365 = vmatpush1.msra.mxu0 0.0
    %366 = vmatprep.subr.mxu0 0.0
    %367 = vmatpush1.msra.mxu0 0.0
    %368 = vmatprep.subr.mxu0 0.0
    %369 = vmatpush1.msra.mxu0 0.0
    %370 = vmatprep.subr.mxu0 0.0
    %371 = vmatpush1.msra.mxu0 0.0
    %372 = vmatprep.subr.mxu0 0.0
    %373 = vmatpush1.msra.mxu0 0.0
    %374 = vmatprep.subr.mxu0 0.0
    %375 = vmatpush1.msra.mxu0 0.0
    %376 = vmatprep.subr.mxu0 0.0
    %377 = vmatpush1.msra.mxu0 0.0
    %378 = vmatprep.mubr.f32.mxu0 0.0
    %379 = vmatmul.mubr.f32.gmra.mrb[0].mxu0 %v312
    %v380 = vpop.f32.mrb[0].mxu0
    %v381 = vadd.f32 0.0, %v380
    %v382 = vpop.f32.mrb[0].mxu0
    %v383 = vadd.f32 0.0, %v382
    %384 = vdwg.mxu0
    %v385 = vadd.f32 %v309, %v381
    %v386 = vadd.f32 %v310, %v383
    %v387 = vxor.u32 %v385, 2147483648
    %v388 = vxor.u32 %v386, 2147483648
    %v389 = vmul.f32 %v387, 1.442695
    %v390 = vpow.pop %v389
    %v391 = vmul.f32 %v388, 1.442695
    %v392 = vpow.pop %v391
    %v393 = vadd.f32 %v390, 1.0
    %v394 = vadd.f32 %v392, 1.0
    %v395 = vrcp.pop %v393
    %v396 = vmul.f32 1.0, %v395
    %v397 = vrcp.pop %v394
    %v398 = vmul.f32 1.0, %v397
    %v399 = vtanh.pop %v386
    %v400 = vmul.f32 %v396, %v199
    %402 = vrot.lane.b32.xlu0 %v399, 64
    %v403 = vpop.permute.xlu0 %402
    %v405 = vmul.f32 %v396, %v403
    %407 = vrot.lane.b32.xlu0 %v405, 64
    %v408 = vpop.permute.xlu0 %407
    %v410 = vadd.f32 %v400, %v408
    %v411 = vtanh.pop %v410
    %413 = vrot.lane.b32.xlu0 %v411, 64
    %v414 = vpop.permute.xlu0 %413
    %v416 = vmul.f32 %v398, %v414
    %418 = vrot.lane.b32.xlu0 %v307, 64
    %v419 = vpop.permute.xlu0 %418
    %v421 = vsel %vm99, %v416, %v419
    %422 = vmatprep.subr.mxu0 %v54
    %423 = vmatpush1.msra.mxu0 %v53
    %424 = vmatprep.subr.mxu0 %v56
    %425 = vmatpush1.msra.mxu0 %v55
    %426 = vmatprep.subr.mxu0 %v58
    %427 = vmatpush1.msra.mxu0 %v57
    %428 = vmatprep.subr.mxu0 %v60
    %429 = vmatpush1.msra.mxu0 %v59
    %430 = vmatprep.subr.mxu0 %v62
    %431 = vmatpush1.msra.mxu0 %v61
    %432 = vmatprep.subr.mxu0 %v64
    %433 = vmatpush1.msra.mxu0 %v63
    %434 = vmatprep.subr.mxu0 %v66
    %435 = vmatpush1.msra.mxu0 %v65
    %436 = vmatprep.subr.mxu0 %v68
    %437 = vmatpush1.msra.mxu0 %v67
    %438 = vmatprep.subr.mxu0 %v70
    %439 = vmatpush1.msra.mxu0 %v69
    %440 = vmatprep.subr.mxu0 %v72
    %441 = vmatpush1.msra.mxu0 %v71
    %442 = vmatprep.subr.mxu0 %v74
    %443 = vmatpush1.msra.mxu0 %v73
    %444 = vmatprep.subr.mxu0 %v76
    %445 = vmatpush1.msra.mxu0 %v75
    %446 = vmatprep.subr.mxu0 %v78
    %447 = vmatpush1.msra.mxu0 %v77
    %448 = vmatprep.subr.mxu0 %v80
    %449 = vmatpush1.msra.mxu0 %v79
    %450 = vmatprep.subr.mxu0 %v82
    %451 = vmatpush1.msra.mxu0 %v81
    %452 = vmatprep.subr.mxu0 %v84
    %453 = vmatpush1.msra.mxu0 %v83
    %454 = vmatprep.subr.mxu0 0.0
    %455 = vmatpush1.msra.mxu0 0.0
    %456 = vmatprep.subr.mxu0 0.0
    %457 = vmatpush1.msra.mxu0 0.0
    %458 = vmatprep.subr.mxu0 0.0
    %459 = vmatpush1.msra.mxu0 0.0
    %460 = vmatprep.subr.mxu0 0.0
    %461 = vmatpush1.msra.mxu0 0.0
    %462 = vmatprep.subr.mxu0 0.0
    %463 = vmatpush1.msra.mxu0 0.0
    %464 = vmatprep.subr.mxu0 0.0
    %465 = vmatpush1.msra.mxu0 0.0
    %466 = vmatprep.subr.mxu0 0.0
    %467 = vmatpush1.msra.mxu0 0.0
    %468 = vmatprep.subr.mxu0 0.0
    %469 = vmatpush1.msra.mxu0 0.0
    %470 = vmatprep.subr.mxu0 0.0
    %471 = vmatpush1.msra.mxu0 0.0
    %472 = vmatprep.subr.mxu0 0.0
    %473 = vmatpush1.msra.mxu0 0.0
    %474 = vmatprep.subr.mxu0 0.0
    %475 = vmatpush1.msra.mxu0 0.0
    %476 = vmatprep.subr.mxu0 0.0
    %477 = vmatpush1.msra.mxu0 0.0
    %478 = vmatprep.subr.mxu0 0.0
    %479 = vmatpush1.msra.mxu0 0.0
    %480 = vmatprep.subr.mxu0 0.0
    %481 = vmatpush1.msra.mxu0 0.0
    %482 = vmatprep.subr.mxu0 0.0
    %483 = vmatpush1.msra.mxu0 0.0
    %484 = vmatprep.subr.mxu0 0.0
    %485 = vmatpush1.msra.mxu0 0.0
    %486 = vmatprep.mubr.f32.mxu0 0.0
    %487 = vmatmul.mubr.f32.gmra.mrb[0].mxu0 %v421
    %v488 = vpop.f32.mrb[0].mxu0
    %v489 = vadd.f32 %v90, %v488
    %v490 = vpop.f32.mrb[0].mxu0
    %v491 = vadd.f32 %v94, %v490
    %492 = vdwg.mxu0
    %v493 = vxor.u32 %v489, 2147483648
    %v494 = vxor.u32 %v491, 2147483648
    %v495 = vmul.f32 %v493, 1.442695
    %v496 = vpow.pop %v495
    %v497 = vmul.f32 %v494, 1.442695
    %v498 = vpow.pop %v497
    %v499 = vadd.f32 %v496, 1.0
    %v500 = vadd.f32 %v498, 1.0
    %v501 = vrcp.pop %v499
    %v502 = vmul.f32 1.0, %v501
    %v503 = vrcp.pop %v500
    %v504 = vmul.f32 1.0, %v503
    %v505 = vtanh.pop %v491
    %v506 = vmul.f32 %v502, %v301
    %508 = vrot.lane.b32.xlu0 %v505, 64
    %v509 = vpop.permute.xlu0 %508
    %v511 = vmul.f32 %v502, %v509
    %513 = vrot.lane.b32.xlu0 %v511, 64
    %v514 = vpop.permute.xlu0 %513
    %v516 = vadd.f32 %v506, %v514
    %v517 = vtanh.pop %v516
    %519 = vrot.lane.b32.xlu0 %v517, 64
    %v520 = vpop.permute.xlu0 %519
    %v522 = vmul.f32 %v504, %v520
    %s523 = scalar_lea.vmem %s0, 32
    %v524 = vld [vmem:[%s523] sm:$0xff]
    %v525 = vld [vmem:[%s523 + $0x8] sm:$0xff]
    %v527 = vsel %vm99, %v416, 0
    %529 = vmatprep.subr.mxu0 %v38
    %530 = vmatpush1.msra.mxu0 %v37
    %531 = vmatprep.subr.mxu0 %v40
    %532 = vmatpush1.msra.mxu0 %v39
    %533 = vmatprep.subr.mxu0 %v42
    %534 = vmatpush1.msra.mxu0 %v41
    %535 = vmatprep.subr.mxu0 %v44
    %536 = vmatpush1.msra.mxu0 %v43
    %537 = vmatprep.subr.mxu0 %v46
    %538 = vmatpush1.msra.mxu0 %v45
    %539 = vmatprep.subr.mxu0 %v48
    %540 = vmatpush1.msra.mxu0 %v47
    %541 = vmatprep.subr.mxu0 %v50
    %542 = vmatpush1.msra.mxu0 %v49
    %543 = vmatprep.subr.mxu0 %v52
    %544 = vmatpush1.msra.mxu0 %v51
    %545 = vmatprep.subr.mxu0 0.0
    %546 = vmatpush1.msra.mxu0 0.0
    %547 = vmatprep.subr.mxu0 0.0
    %548 = vmatpush1.msra.mxu0 0.0
    %549 = vmatprep.subr.mxu0 0.0
    %550 = vmatpush1.msra.mxu0 0.0
    %551 = vmatprep.subr.mxu0 0.0
    %552 = vmatpush1.msra.mxu0 0.0
    %553 = vmatprep.subr.mxu0 0.0
    %554 = vmatpush1.msra.mxu0 0.0
    %555 = vmatprep.subr.mxu0 0.0
    %556 = vmatpush1.msra.mxu0 0.0
    %557 = vmatprep.subr.mxu0 0.0
    %558 = vmatpush1.msra.mxu0 0.0
    %559 = vmatprep.subr.mxu0 0.0
    %560 = vmatpush1.msra.mxu0 0.0
    %561 = vmatprep.subr.mxu0 0.0
    %562 = vmatpush1.msra.mxu0 0.0
    %563 = vmatprep.subr.mxu0 0.0
    %564 = vmatpush1.msra.mxu0 0.0
    %565 = vmatprep.subr.mxu0 0.0
    %566 = vmatpush1.msra.mxu0 0.0
    %567 = vmatprep.subr.mxu0 0.0
    %568 = vmatpush1.msra.mxu0 0.0
    %569 = vmatprep.subr.mxu0 0.0
    %570 = vmatpush1.msra.mxu0 0.0
    %571 = vmatprep.subr.mxu0 0.0
    %572 = vmatpush1.msra.mxu0 0.0
    %573 = vmatprep.subr.mxu0 0.0
    %574 = vmatpush1.msra.mxu0 0.0
    %575 = vmatprep.subr.mxu0 0.0
    %576 = vmatpush1.msra.mxu0 0.0
    %577 = vmatprep.subr.mxu0 0.0
    %578 = vmatpush1.msra.mxu0 0.0
    %579 = vmatprep.subr.mxu0 0.0
    %580 = vmatpush1.msra.mxu0 0.0
    %581 = vmatprep.subr.mxu0 0.0
    %582 = vmatpush1.msra.mxu0 0.0
    %583 = vmatprep.subr.mxu0 0.0
    %584 = vmatpush1.msra.mxu0 0.0
    %585 = vmatprep.subr.mxu0 0.0
    %586 = vmatpush1.msra.mxu0 0.0
    %587 = vmatprep.subr.mxu0 0.0
    %588 = vmatpush1.msra.mxu0 0.0
    %589 = vmatprep.subr.mxu0 0.0
    %590 = vmatpush1.msra.mxu0 0.0
    %591 = vmatprep.subr.mxu0 0.0
    %592 = vmatpush1.msra.mxu0 0.0
    %593 = vmatprep.mubr.f32.mxu0 0.0
    %594 = vmatmul.mubr.f32.gmra.mrb[0].mxu0 %v527
    %v595 = vpop.f32.mrb[0].mxu0
    %v596 = vadd.f32 0.0, %v595
    %v597 = vpop.f32.mrb[0].mxu0
    %v598 = vadd.f32 0.0, %v597
    %599 = vdwg.mxu0
    %v600 = vadd.f32 %v524, %v596
    %v601 = vadd.f32 %v525, %v598
    %v602 = vxor.u32 %v600, 2147483648
    %v603 = vxor.u32 %v601, 2147483648
    %v604 = vmul.f32 %v602, 1.442695
    %v605 = vpow.pop %v604
    %v606 = vmul.f32 %v603, 1.442695
    %v607 = vpow.pop %v606
    %v608 = vadd.f32 %v605, 1.0
    %v609 = vadd.f32 %v607, 1.0
    %v610 = vrcp.pop %v608
    %v611 = vmul.f32 1.0, %v610
    %v612 = vrcp.pop %v609
    %v613 = vmul.f32 1.0, %v612
    %v614 = vtanh.pop %v601
    %v615 = vmul.f32 %v611, %v410
    %617 = vrot.lane.b32.xlu0 %v614, 64
    %v618 = vpop.permute.xlu0 %617
    %v620 = vmul.f32 %v611, %v618
    %622 = vrot.lane.b32.xlu0 %v620, 64
    %v623 = vpop.permute.xlu0 %622
    %v625 = vadd.f32 %v615, %v623
    %v626 = vtanh.pop %v625
    %628 = vrot.lane.b32.xlu0 %v626, 64
    %v629 = vpop.permute.xlu0 %628
    %v631 = vmul.f32 %v613, %v629
    %633 = vrot.lane.b32.xlu0 %v522, 64
    %v634 = vpop.permute.xlu0 %633
    %v636 = vsel %vm99, %v631, %v634
    %637 = vmatprep.subr.mxu0 %v54
    %638 = vmatpush1.msra.mxu0 %v53
    %639 = vmatprep.subr.mxu0 %v56
    %640 = vmatpush1.msra.mxu0 %v55
    %641 = vmatprep.subr.mxu0 %v58
    %642 = vmatpush1.msra.mxu0 %v57
    %643 = vmatprep.subr.mxu0 %v60
    %644 = vmatpush1.msra.mxu0 %v59
    %645 = vmatprep.subr.mxu0 %v62
    %646 = vmatpush1.msra.mxu0 %v61
    %647 = vmatprep.subr.mxu0 %v64
    %648 = vmatpush1.msra.mxu0 %v63
    %649 = vmatprep.subr.mxu0 %v66
    %650 = vmatpush1.msra.mxu0 %v65
    %651 = vmatprep.subr.mxu0 %v68
    %652 = vmatpush1.msra.mxu0 %v67
    %653 = vmatprep.subr.mxu0 %v70
    %654 = vmatpush1.msra.mxu0 %v69
    %655 = vmatprep.subr.mxu0 %v72
    %656 = vmatpush1.msra.mxu0 %v71
    %657 = vmatprep.subr.mxu0 %v74
    %658 = vmatpush1.msra.mxu0 %v73
    %659 = vmatprep.subr.mxu0 %v76
    %660 = vmatpush1.msra.mxu0 %v75
    %661 = vmatprep.subr.mxu0 %v78
    %662 = vmatpush1.msra.mxu0 %v77
    %663 = vmatprep.subr.mxu0 %v80
    %664 = vmatpush1.msra.mxu0 %v79
    %665 = vmatprep.subr.mxu0 %v82
    %666 = vmatpush1.msra.mxu0 %v81
    %667 = vmatprep.subr.mxu0 %v84
    %668 = vmatpush1.msra.mxu0 %v83
    %669 = vmatprep.subr.mxu0 0.0
    %670 = vmatpush1.msra.mxu0 0.0
    %671 = vmatprep.subr.mxu0 0.0
    %672 = vmatpush1.msra.mxu0 0.0
    %673 = vmatprep.subr.mxu0 0.0
    %674 = vmatpush1.msra.mxu0 0.0
    %675 = vmatprep.subr.mxu0 0.0
    %676 = vmatpush1.msra.mxu0 0.0
    %677 = vmatprep.subr.mxu0 0.0
    %678 = vmatpush1.msra.mxu0 0.0
    %679 = vmatprep.subr.mxu0 0.0
    %680 = vmatpush1.msra.mxu0 0.0
    %681 = vmatprep.subr.mxu0 0.0
    %682 = vmatpush1.msra.mxu0 0.0
    %683 = vmatprep.subr.mxu0 0.0
    %684 = vmatpush1.msra.mxu0 0.0
    %685 = vmatprep.subr.mxu0 0.0
    %686 = vmatpush1.msra.mxu0 0.0
    %687 = vmatprep.subr.mxu0 0.0
    %688 = vmatpush1.msra.mxu0 0.0
    %689 = vmatprep.subr.mxu0 0.0
    %690 = vmatpush1.msra.mxu0 0.0
    %691 = vmatprep.subr.mxu0 0.0
    %692 = vmatpush1.msra.mxu0 0.0
    %693 = vmatprep.subr.mxu0 0.0
    %694 = vmatpush1.msra.mxu0 0.0
    %695 = vmatprep.subr.mxu0 0.0
    %696 = vmatpush1.msra.mxu0 0.0
    %697 = vmatprep.subr.mxu0 0.0
    %698 = vmatpush1.msra.mxu0 0.0
    %699 = vmatprep.subr.mxu0 0.0
    %700 = vmatpush1.msra.mxu0 0.0
    %701 = vmatprep.mubr.f32.mxu0 0.0
    %702 = vmatmul.mubr.f32.gmra.mrb[0].mxu0 %v636
    %v703 = vpop.f32.mrb[0].mxu0
    %v704 = vadd.f32 %v90, %v703
    %v705 = vpop.f32.mrb[0].mxu0
    %v706 = vadd.f32 %v94, %v705
    %707 = vdwg.mxu0
    %v708 = vxor.u32 %v704, 2147483648
    %v709 = vxor.u32 %v706, 2147483648
    %v710 = vmul.f32 %v708, 1.442695
    %v711 = vpow.pop %v710
    %v712 = vmul.f32 %v709, 1.442695
    %v713 = vpow.pop %v712
    %v714 = vadd.f32 %v711, 1.0
    %v715 = vadd.f32 %v713, 1.0
    %v716 = vrcp.pop %v714
    %v717 = vmul.f32 1.0, %v716
    %v718 = vrcp.pop %v715
    %v719 = vmul.f32 1.0, %v718
    %v720 = vtanh.pop %v706
    %v721 = vmul.f32 %v717, %v516
    %723 = vrot.lane.b32.xlu0 %v720, 64
    %v724 = vpop.permute.xlu0 %723
    %v726 = vmul.f32 %v717, %v724
    %728 = vrot.lane.b32.xlu0 %v726, 64
    %v729 = vpop.permute.xlu0 %728
    %v731 = vadd.f32 %v721, %v729
    %v732 = vtanh.pop %v731
    %734 = vrot.lane.b32.xlu0 %v732, 64
    %v735 = vpop.permute.xlu0 %734
    %v737 = vmul.f32 %v719, %v735
    %s738 = scalar_lea.vmem %s0, 48
    %v739 = vld [vmem:[%s738] sm:$0xff]
    %v740 = vld [vmem:[%s738 + $0x8] sm:$0xff]
    %v742 = vsel %vm99, %v631, 0
    %744 = vmatprep.subr.mxu0 %v38
    %745 = vmatpush1.msra.mxu0 %v37
    %746 = vmatprep.subr.mxu0 %v40
    %747 = vmatpush1.msra.mxu0 %v39
    %748 = vmatprep.subr.mxu0 %v42
    %749 = vmatpush1.msra.mxu0 %v41
    %750 = vmatprep.subr.mxu0 %v44
    %751 = vmatpush1.msra.mxu0 %v43
    %752 = vmatprep.subr.mxu0 %v46
    %753 = vmatpush1.msra.mxu0 %v45
    %754 = vmatprep.subr.mxu0 %v48
    %755 = vmatpush1.msra.mxu0 %v47
    %756 = vmatprep.subr.mxu0 %v50
    %757 = vmatpush1.msra.mxu0 %v49
    %758 = vmatprep.subr.mxu0 %v52
    %759 = vmatpush1.msra.mxu0 %v51
    %760 = vmatprep.subr.mxu0 0.0
    %761 = vmatpush1.msra.mxu0 0.0
    %762 = vmatprep.subr.mxu0 0.0
    %763 = vmatpush1.msra.mxu0 0.0
    %764 = vmatprep.subr.mxu0 0.0
    %765 = vmatpush1.msra.mxu0 0.0
    %766 = vmatprep.subr.mxu0 0.0
    %767 = vmatpush1.msra.mxu0 0.0
    %768 = vmatprep.subr.mxu0 0.0
    %769 = vmatpush1.msra.mxu0 0.0
    %770 = vmatprep.subr.mxu0 0.0
    %771 = vmatpush1.msra.mxu0 0.0
    %772 = vmatprep.subr.mxu0 0.0
    %773 = vmatpush1.msra.mxu0 0.0
    %774 = vmatprep.subr.mxu0 0.0
    %775 = vmatpush1.msra.mxu0 0.0
    %776 = vmatprep.subr.mxu0 0.0
    %777 = vmatpush1.msra.mxu0 0.0
    %778 = vmatprep.subr.mxu0 0.0
    %779 = vmatpush1.msra.mxu0 0.0
    %780 = vmatprep.subr.mxu0 0.0
    %781 = vmatpush1.msra.mxu0 0.0
    %782 = vmatprep.subr.mxu0 0.0
    %783 = vmatpush1.msra.mxu0 0.0
    %784 = vmatprep.subr.mxu0 0.0
    %785 = vmatpush1.msra.mxu0 0.0
    %786 = vmatprep.subr.mxu0 0.0
    %787 = vmatpush1.msra.mxu0 0.0
    %788 = vmatprep.subr.mxu0 0.0
    %789 = vmatpush1.msra.mxu0 0.0
    %790 = vmatprep.subr.mxu0 0.0
    %791 = vmatpush1.msra.mxu0 0.0
    %792 = vmatprep.subr.mxu0 0.0
    %793 = vmatpush1.msra.mxu0 0.0
    %794 = vmatprep.subr.mxu0 0.0
    %795 = vmatpush1.msra.mxu0 0.0
    %796 = vmatprep.subr.mxu0 0.0
    %797 = vmatpush1.msra.mxu0 0.0
    %798 = vmatprep.subr.mxu0 0.0
    %799 = vmatpush1.msra.mxu0 0.0
    %800 = vmatprep.subr.mxu0 0.0
    %801 = vmatpush1.msra.mxu0 0.0
    %802 = vmatprep.subr.mxu0 0.0
    %803 = vmatpush1.msra.mxu0 0.0
    %804 = vmatprep.subr.mxu0 0.0
    %805 = vmatpush1.msra.mxu0 0.0
    %806 = vmatprep.subr.mxu0 0.0
    %807 = vmatpush1.msra.mxu0 0.0
    %808 = vmatprep.mubr.f32.mxu0 0.0
    %809 = vmatmul.mubr.f32.gmra.mrb[0].mxu0 %v742
    %v810 = vpop.f32.mrb[0].mxu0
    %v811 = vadd.f32 0.0, %v810
    %v812 = vpop.f32.mrb[0].mxu0
    %v813 = vadd.f32 0.0, %v812
    %814 = vdwg.mxu0
    %v815 = vadd.f32 %v739, %v811
    %v816 = vadd.f32 %v740, %v813
    %v817 = vxor.u32 %v815, 2147483648
    %v818 = vxor.u32 %v816, 2147483648
    %v819 = vmul.f32 %v817, 1.442695
    %v820 = vpow.pop %v819
    %v821 = vmul.f32 %v818, 1.442695
    %v822 = vpow.pop %v821
    %v823 = vadd.f32 %v820, 1.0
    %v824 = vadd.f32 %v822, 1.0
    %v825 = vrcp.pop %v823
    %v826 = vmul.f32 1.0, %v825
    %v827 = vrcp.pop %v824
    %v828 = vmul.f32 1.0, %v827
    %v829 = vtanh.pop %v816
    %v830 = vmul.f32 %v826, %v625
    %832 = vrot.lane.b32.xlu0 %v829, 64
    %v833 = vpop.permute.xlu0 %832
    %v835 = vmul.f32 %v826, %v833
    %837 = vrot.lane.b32.xlu0 %v835, 64
    %v838 = vpop.permute.xlu0 %837
    %v840 = vadd.f32 %v830, %v838
    %v841 = vtanh.pop %v840
    %843 = vrot.lane.b32.xlu0 %v841, 64
    %v844 = vpop.permute.xlu0 %843
    %v846 = vmul.f32 %v828, %v844
    %848 = vrot.lane.b32.xlu0 %v737, 64
    %v849 = vpop.permute.xlu0 %848
    %v851 = vsel %vm99, %v846, %v849
    %852 = vmatprep.subr.mxu0 %v54
    %853 = vmatpush1.msra.mxu0 %v53
    %854 = vmatprep.subr.mxu0 %v56
    %855 = vmatpush1.msra.mxu0 %v55
    %856 = vmatprep.subr.mxu0 %v58
    %857 = vmatpush1.msra.mxu0 %v57
    %858 = vmatprep.subr.mxu0 %v60
    %859 = vmatpush1.msra.mxu0 %v59
    %860 = vmatprep.subr.mxu0 %v62
    %861 = vmatpush1.msra.mxu0 %v61
    %862 = vmatprep.subr.mxu0 %v64
    %863 = vmatpush1.msra.mxu0 %v63
    %864 = vmatprep.subr.mxu0 %v66
    %865 = vmatpush1.msra.mxu0 %v65
    %866 = vmatprep.subr.mxu0 %v68
    %867 = vmatpush1.msra.mxu0 %v67
    %868 = vmatprep.subr.mxu0 %v70
    %869 = vmatpush1.msra.mxu0 %v69
    %870 = vmatprep.subr.mxu0 %v72
    %871 = vmatpush1.msra.mxu0 %v71
    %872 = vmatprep.subr.mxu0 %v74
    %873 = vmatpush1.msra.mxu0 %v73
    %874 = vmatprep.subr.mxu0 %v76
    %875 = vmatpush1.msra.mxu0 %v75
    %876 = vmatprep.subr.mxu0 %v78
    %877 = vmatpush1.msra.mxu0 %v77
    %878 = vmatprep.subr.mxu0 %v80
    %879 = vmatpush1.msra.mxu0 %v79
    %880 = vmatprep.subr.mxu0 %v82
    %881 = vmatpush1.msra.mxu0 %v81
    %882 = vmatprep.subr.mxu0 %v84
    %883 = vmatpush1.msra.mxu0 %v83
    %884 = vmatprep.subr.mxu0 0.0
    %885 = vmatpush1.msra.mxu0 0.0
    %886 = vmatprep.subr.mxu0 0.0
    %887 = vmatpush1.msra.mxu0 0.0
    %888 = vmatprep.subr.mxu0 0.0
    %889 = vmatpush1.msra.mxu0 0.0
    %890 = vmatprep.subr.mxu0 0.0
    %891 = vmatpush1.msra.mxu0 0.0
    %892 = vmatprep.subr.mxu0 0.0
    %893 = vmatpush1.msra.mxu0 0.0
    %894 = vmatprep.subr.mxu0 0.0
    %895 = vmatpush1.msra.mxu0 0.0
    %896 = vmatprep.subr.mxu0 0.0
    %897 = vmatpush1.msra.mxu0 0.0
    %898 = vmatprep.subr.mxu0 0.0
    %899 = vmatpush1.msra.mxu0 0.0
    %900 = vmatprep.subr.mxu0 0.0
    %901 = vmatpush1.msra.mxu0 0.0
    %902 = vmatprep.subr.mxu0 0.0
    %903 = vmatpush1.msra.mxu0 0.0
    %904 = vmatprep.subr.mxu0 0.0
    %905 = vmatpush1.msra.mxu0 0.0
    %906 = vmatprep.subr.mxu0 0.0
    %907 = vmatpush1.msra.mxu0 0.0
    %908 = vmatprep.subr.mxu0 0.0
    %909 = vmatpush1.msra.mxu0 0.0
    %910 = vmatprep.subr.mxu0 0.0
    %911 = vmatpush1.msra.mxu0 0.0
    %912 = vmatprep.subr.mxu0 0.0
    %913 = vmatpush1.msra.mxu0 0.0
    %914 = vmatprep.subr.mxu0 0.0
    %915 = vmatpush1.msra.mxu0 0.0
    %916 = vmatprep.mubr.f32.mxu0 0.0
    %917 = vmatmul.mubr.f32.gmra.mrb[0].mxu0 %v851
    %v918 = vpop.f32.mrb[0].mxu0
    %v919 = vadd.f32 %v90, %v918
    %v920 = vpop.f32.mrb[0].mxu0
    %v921 = vadd.f32 %v94, %v920
    %922 = vdwg.mxu0
    %v923 = vxor.u32 %v919, 2147483648
    %v924 = vxor.u32 %v921, 2147483648
    %v925 = vmul.f32 %v923, 1.442695
    %v926 = vpow.pop %v925
    %v927 = vmul.f32 %v924, 1.442695
    %v928 = vpow.pop %v927
    %v929 = vadd.f32 %v926, 1.0
    %v930 = vadd.f32 %v928, 1.0
    %v931 = vrcp.pop %v929
    %v932 = vmul.f32 1.0, %v931
    %v933 = vrcp.pop %v930
    %v934 = vmul.f32 1.0, %v933
    %v935 = vtanh.pop %v921
    %v936 = vmul.f32 %v932, %v731
    %938 = vrot.lane.b32.xlu0 %v935, 64
    %v939 = vpop.permute.xlu0 %938
    %v941 = vmul.f32 %v932, %v939
    %943 = vrot.lane.b32.xlu0 %v941, 64
    %v944 = vpop.permute.xlu0 %943
    %v946 = vadd.f32 %v936, %v944
    %v947 = vtanh.pop %v946
    %949 = vrot.lane.b32.xlu0 %v947, 64
    %v950 = vpop.permute.xlu0 %949
    %v952 = vmul.f32 %v934, %v950
    %s953 = scalar_lea.vmem %s0, 64
    %v954 = vld [vmem:[%s953] sm:$0xff]
    %v955 = vld [vmem:[%s953 + $0x8] sm:$0xff]
    %v957 = vsel %vm99, %v846, 0
    %959 = vmatprep.subr.mxu0 %v38
    %960 = vmatpush1.msra.mxu0 %v37
    %961 = vmatprep.subr.mxu0 %v40
    %962 = vmatpush1.msra.mxu0 %v39
    %963 = vmatprep.subr.mxu0 %v42
    %964 = vmatpush1.msra.mxu0 %v41
    %965 = vmatprep.subr.mxu0 %v44
    %966 = vmatpush1.msra.mxu0 %v43
    %967 = vmatprep.subr.mxu0 %v46
    %968 = vmatpush1.msra.mxu0 %v45
    %969 = vmatprep.subr.mxu0 %v48
    %970 = vmatpush1.msra.mxu0 %v47
    %971 = vmatprep.subr.mxu0 %v50
    %972 = vmatpush1.msra.mxu0 %v49
    %973 = vmatprep.subr.mxu0 %v52
    %974 = vmatpush1.msra.mxu0 %v51
    %975 = vmatprep.subr.mxu0 0.0
    %976 = vmatpush1.msra.mxu0 0.0
    %977 = vmatprep.subr.mxu0 0.0
    %978 = vmatpush1.msra.mxu0 0.0
    %979 = vmatprep.subr.mxu0 0.0
    %980 = vmatpush1.msra.mxu0 0.0
    %981 = vmatprep.subr.mxu0 0.0
    %982 = vmatpush1.msra.mxu0 0.0
    %983 = vmatprep.subr.mxu0 0.0
    %984 = vmatpush1.msra.mxu0 0.0
    %985 = vmatprep.subr.mxu0 0.0
    %986 = vmatpush1.msra.mxu0 0.0
    %987 = vmatprep.subr.mxu0 0.0
    %988 = vmatpush1.msra.mxu0 0.0
    %989 = vmatprep.subr.mxu0 0.0
    %990 = vmatpush1.msra.mxu0 0.0
    %991 = vmatprep.subr.mxu0 0.0
    %992 = vmatpush1.msra.mxu0 0.0
    %993 = vmatprep.subr.mxu0 0.0
    %994 = vmatpush1.msra.mxu0 0.0
    %995 = vmatprep.subr.mxu0 0.0
    %996 = vmatpush1.msra.mxu0 0.0
    %997 = vmatprep.subr.mxu0 0.0
    %998 = vmatpush1.msra.mxu0 0.0
    %999 = vmatprep.subr.mxu0 0.0
    %1000 = vmatpush1.msra.mxu0 0.0
    %1001 = vmatprep.subr.mxu0 0.0
    %1002 = vmatpush1.msra.mxu0 0.0
    %1003 = vmatprep.subr.mxu0 0.0
    %1004 = vmatpush1.msra.mxu0 0.0
    %1005 = vmatprep.subr.mxu0 0.0
    %1006 = vmatpush1.msra.mxu0 0.0
    %1007 = vmatprep.subr.mxu0 0.0
    %1008 = vmatpush1.msra.mxu0 0.0
    %1009 = vmatprep.subr.mxu0 0.0
    %1010 = vmatpush1.msra.mxu0 0.0
    %1011 = vmatprep.subr.mxu0 0.0
    %1012 = vmatpush1.msra.mxu0 0.0
    %1013 = vmatprep.subr.mxu0 0.0
    %1014 = vmatpush1.msra.mxu0 0.0
    %1015 = vmatprep.subr.mxu0 0.0
    %1016 = vmatpush1.msra.mxu0 0.0
    %1017 = vmatprep.subr.mxu0 0.0
    %1018 = vmatpush1.msra.mxu0 0.0
    %1019 = vmatprep.subr.mxu0 0.0
    %1020 = vmatpush1.msra.mxu0 0.0
    %1021 = vmatprep.subr.mxu0 0.0
    %1022 = vmatpush1.msra.mxu0 0.0
    %1023 = vmatprep.mubr.f32.mxu0 0.0
    %1024 = vmatmul.mubr.f32.gmra.mrb[0].mxu0 %v957
    %v1025 = vpop.f32.mrb[0].mxu0
    %v1026 = vadd.f32 0.0, %v1025
    %v1027 = vpop.f32.mrb[0].mxu0
    %v1028 = vadd.f32 0.0, %v1027
    %1029 = vdwg.mxu0
    %v1030 = vadd.f32 %v954, %v1026
    %v1031 = vadd.f32 %v955, %v1028
    %v1032 = vxor.u32 %v1030, 2147483648
    %v1033 = vxor.u32 %v1031, 2147483648
    %v1034 = vmul.f32 %v1032, 1.442695
    %v1035 = vpow.pop %v1034
    %v1036 = vmul.f32 %v1033, 1.442695
    %v1037 = vpow.pop %v1036
    %v1038 = vadd.f32 %v1035, 1.0
    %v1039 = vadd.f32 %v1037, 1.0
    %v1040 = vrcp.pop %v1038
    %v1041 = vmul.f32 1.0, %v1040
    %v1042 = vrcp.pop %v1039
    %v1043 = vmul.f32 1.0, %v1042
    %v1044 = vtanh.pop %v1031
    %v1045 = vmul.f32 %v1041, %v840
    %1047 = vrot.lane.b32.xlu0 %v1044, 64
    %v1048 = vpop.permute.xlu0 %1047
    %v1050 = vmul.f32 %v1041, %v1048
    %1052 = vrot.lane.b32.xlu0 %v1050, 64
    %v1053 = vpop.permute.xlu0 %1052
    %v1055 = vadd.f32 %v1045, %v1053
    %v1056 = vtanh.pop %v1055
    %1058 = vrot.lane.b32.xlu0 %v1056, 64
    %v1059 = vpop.permute.xlu0 %1058
    %v1061 = vmul.f32 %v1043, %v1059
    %1063 = vrot.lane.b32.xlu0 %v952, 64
    %v1064 = vpop.permute.xlu0 %1063
    %v1066 = vsel %vm99, %v1061, %v1064
    %1067 = vmatprep.subr.mxu0 %v54
    %1068 = vmatpush1.msra.mxu0 %v53
    %1069 = vmatprep.subr.mxu0 %v56
    %1070 = vmatpush1.msra.mxu0 %v55
    %1071 = vmatprep.subr.mxu0 %v58
    %1072 = vmatpush1.msra.mxu0 %v57
    %1073 = vmatprep.subr.mxu0 %v60
    %1074 = vmatpush1.msra.mxu0 %v59
    %1075 = vmatprep.subr.mxu0 %v62
    %1076 = vmatpush1.msra.mxu0 %v61
    %1077 = vmatprep.subr.mxu0 %v64
    %1078 = vmatpush1.msra.mxu0 %v63
    %1079 = vmatprep.subr.mxu0 %v66
    %1080 = vmatpush1.msra.mxu0 %v65
    %1081 = vmatprep.subr.mxu0 %v68
    %1082 = vmatpush1.msra.mxu0 %v67
    %1083 = vmatprep.subr.mxu0 %v70
    %1084 = vmatpush1.msra.mxu0 %v69
    %1085 = vmatprep.subr.mxu0 %v72
    %1086 = vmatpush1.msra.mxu0 %v71
    %1087 = vmatprep.subr.mxu0 %v74
    %1088 = vmatpush1.msra.mxu0 %v73
    %1089 = vmatprep.subr.mxu0 %v76
    %1090 = vmatpush1.msra.mxu0 %v75
    %1091 = vmatprep.subr.mxu0 %v78
    %1092 = vmatpush1.msra.mxu0 %v77
    %1093 = vmatprep.subr.mxu0 %v80
    %1094 = vmatpush1.msra.mxu0 %v79
    %1095 = vmatprep.subr.mxu0 %v82
    %1096 = vmatpush1.msra.mxu0 %v81
    %1097 = vmatprep.subr.mxu0 %v84
    %1098 = vmatpush1.msra.mxu0 %v83
    %1099 = vmatprep.subr.mxu0 0.0
    %1100 = vmatpush1.msra.mxu0 0.0
    %1101 = vmatprep.subr.mxu0 0.0
    %1102 = vmatpush1.msra.mxu0 0.0
    %1103 = vmatprep.subr.mxu0 0.0
    %1104 = vmatpush1.msra.mxu0 0.0
    %1105 = vmatprep.subr.mxu0 0.0
    %1106 = vmatpush1.msra.mxu0 0.0
    %1107 = vmatprep.subr.mxu0 0.0
    %1108 = vmatpush1.msra.mxu0 0.0
    %1109 = vmatprep.subr.mxu0 0.0
    %1110 = vmatpush1.msra.mxu0 0.0
    %1111 = vmatprep.subr.mxu0 0.0
    %1112 = vmatpush1.msra.mxu0 0.0
    %1113 = vmatprep.subr.mxu0 0.0
    %1114 = vmatpush1.msra.mxu0 0.0
    %1115 = vmatprep.subr.mxu0 0.0
    %1116 = vmatpush1.msra.mxu0 0.0
    %1117 = vmatprep.subr.mxu0 0.0
    %1118 = vmatpush1.msra.mxu0 0.0
    %1119 = vmatprep.subr.mxu0 0.0
    %1120 = vmatpush1.msra.mxu0 0.0
    %1121 = vmatprep.subr.mxu0 0.0
    %1122 = vmatpush1.msra.mxu0 0.0
    %1123 = vmatprep.subr.mxu0 0.0
    %1124 = vmatpush1.msra.mxu0 0.0
    %1125 = vmatprep.subr.mxu0 0.0
    %1126 = vmatpush1.msra.mxu0 0.0
    %1127 = vmatprep.subr.mxu0 0.0
    %1128 = vmatpush1.msra.mxu0 0.0
    %1129 = vmatprep.subr.mxu0 0.0
    %1130 = vmatpush1.msra.mxu0 0.0
    %1131 = vmatprep.mubr.f32.mxu0 0.0
    %1132 = vmatmul.mubr.f32.gmra.mrb[0].mxu0 %v1066
    %v1133 = vpop.f32.mrb[0].mxu0
    %v1134 = vadd.f32 %v90, %v1133
    %v1135 = vpop.f32.mrb[0].mxu0
    %v1136 = vadd.f32 %v94, %v1135
    %1137 = vdwg.mxu0
    %v1138 = vxor.u32 %v1134, 2147483648
    %v1139 = vxor.u32 %v1136, 2147483648
    %v1140 = vmul.f32 %v1138, 1.442695
    %v1141 = vpow.pop %v1140
    %v1142 = vmul.f32 %v1139, 1.442695
    %v1143 = vpow.pop %v1142
    %v1144 = vadd.f32 %v1141, 1.0
    %v1145 = vadd.f32 %v1143, 1.0
    %v1146 = vrcp.pop %v1144
    %v1147 = vmul.f32 1.0, %v1146
    %v1148 = vrcp.pop %v1145
    %v1149 = vmul.f32 1.0, %v1148
    %v1150 = vtanh.pop %v1136
    %v1151 = vmul.f32 %v1147, %v946
    %1153 = vrot.lane.b32.xlu0 %v1150, 64
    %v1154 = vpop.permute.xlu0 %1153
    %v1156 = vmul.f32 %v1147, %v1154
    %1158 = vrot.lane.b32.xlu0 %v1156, 64
    %v1159 = vpop.permute.xlu0 %1158
    %v1161 = vadd.f32 %v1151, %v1159
    %v1162 = vtanh.pop %v1161
    %1164 = vrot.lane.b32.xlu0 %v1162, 64
    %v1165 = vpop.permute.xlu0 %1164
    %v1167 = vmul.f32 %v1149, %v1165
    %s1168 = scalar_lea.vmem %s0, 80
    %v1169 = vld [vmem:[%s1168] sm:$0xff]
    %v1170 = vld [vmem:[%s1168 + $0x8] sm:$0xff]
    %v1172 = vsel %vm99, %v1061, 0
    %1174 = vmatprep.subr.mxu0 %v38
    %1175 = vmatpush1.msra.mxu0 %v37
    %1176 = vmatprep.subr.mxu0 %v40
    %1177 = vmatpush1.msra.mxu0 %v39
    %1178 = vmatprep.subr.mxu0 %v42
    %1179 = vmatpush1.msra.mxu0 %v41
    %1180 = vmatprep.subr.mxu0 %v44
    %1181 = vmatpush1.msra.mxu0 %v43
    %1182 = vmatprep.subr.mxu0 %v46
    %1183 = vmatpush1.msra.mxu0 %v45
    %1184 = vmatprep.subr.mxu0 %v48
    %1185 = vmatpush1.msra.mxu0 %v47
    %1186 = vmatprep.subr.mxu0 %v50
    %1187 = vmatpush1.msra.mxu0 %v49
    %1188 = vmatprep.subr.mxu0 %v52
    %1189 = vmatpush1.msra.mxu0 %v51
    %1190 = vmatprep.subr.mxu0 0.0
    %1191 = vmatpush1.msra.mxu0 0.0
    %1192 = vmatprep.subr.mxu0 0.0
    %1193 = vmatpush1.msra.mxu0 0.0
    %1194 = vmatprep.subr.mxu0 0.0
    %1195 = vmatpush1.msra.mxu0 0.0
    %1196 = vmatprep.subr.mxu0 0.0
    %1197 = vmatpush1.msra.mxu0 0.0
    %1198 = vmatprep.subr.mxu0 0.0
    %1199 = vmatpush1.msra.mxu0 0.0
    %1200 = vmatprep.subr.mxu0 0.0
    %1201 = vmatpush1.msra.mxu0 0.0
    %1202 = vmatprep.subr.mxu0 0.0
    %1203 = vmatpush1.msra.mxu0 0.0
    %1204 = vmatprep.subr.mxu0 0.0
    %1205 = vmatpush1.msra.mxu0 0.0
    %1206 = vmatprep.subr.mxu0 0.0
    %1207 = vmatpush1.msra.mxu0 0.0
    %1208 = vmatprep.subr.mxu0 0.0
    %1209 = vmatpush1.msra.mxu0 0.0
    %1210 = vmatprep.subr.mxu0 0.0
    %1211 = vmatpush1.msra.mxu0 0.0
    %1212 = vmatprep.subr.mxu0 0.0
    %1213 = vmatpush1.msra.mxu0 0.0
    %1214 = vmatprep.subr.mxu0 0.0
    %1215 = vmatpush1.msra.mxu0 0.0
    %1216 = vmatprep.subr.mxu0 0.0
    %1217 = vmatpush1.msra.mxu0 0.0
    %1218 = vmatprep.subr.mxu0 0.0
    %1219 = vmatpush1.msra.mxu0 0.0
    %1220 = vmatprep.subr.mxu0 0.0
    %1221 = vmatpush1.msra.mxu0 0.0
    %1222 = vmatprep.subr.mxu0 0.0
    %1223 = vmatpush1.msra.mxu0 0.0
    %1224 = vmatprep.subr.mxu0 0.0
    %1225 = vmatpush1.msra.mxu0 0.0
    %1226 = vmatprep.subr.mxu0 0.0
    %1227 = vmatpush1.msra.mxu0 0.0
    %1228 = vmatprep.subr.mxu0 0.0
    %1229 = vmatpush1.msra.mxu0 0.0
    %1230 = vmatprep.subr.mxu0 0.0
    %1231 = vmatpush1.msra.mxu0 0.0
    %1232 = vmatprep.subr.mxu0 0.0
    %1233 = vmatpush1.msra.mxu0 0.0
    %1234 = vmatprep.subr.mxu0 0.0
    %1235 = vmatpush1.msra.mxu0 0.0
    %1236 = vmatprep.subr.mxu0 0.0
    %1237 = vmatpush1.msra.mxu0 0.0
    %1238 = vmatprep.mubr.f32.mxu0 0.0
    %1239 = vmatmul.mubr.f32.gmra.mrb[0].mxu0 %v1172
    %v1240 = vpop.f32.mrb[0].mxu0
    %v1241 = vadd.f32 0.0, %v1240
    %v1242 = vpop.f32.mrb[0].mxu0
    %v1243 = vadd.f32 0.0, %v1242
    %1244 = vdwg.mxu0
    %v1245 = vadd.f32 %v1169, %v1241
    %v1246 = vadd.f32 %v1170, %v1243
    %v1247 = vxor.u32 %v1245, 2147483648
    %v1248 = vxor.u32 %v1246, 2147483648
    %v1249 = vmul.f32 %v1247, 1.442695
    %v1250 = vpow.pop %v1249
    %v1251 = vmul.f32 %v1248, 1.442695
    %v1252 = vpow.pop %v1251
    %v1253 = vadd.f32 %v1250, 1.0
    %v1254 = vadd.f32 %v1252, 1.0
    %v1255 = vrcp.pop %v1253
    %v1256 = vmul.f32 1.0, %v1255
    %v1257 = vrcp.pop %v1254
    %v1258 = vmul.f32 1.0, %v1257
    %v1259 = vtanh.pop %v1246
    %v1260 = vmul.f32 %v1256, %v1055
    %1262 = vrot.lane.b32.xlu0 %v1259, 64
    %v1263 = vpop.permute.xlu0 %1262
    %v1265 = vmul.f32 %v1256, %v1263
    %1267 = vrot.lane.b32.xlu0 %v1265, 64
    %v1268 = vpop.permute.xlu0 %1267
    %v1270 = vadd.f32 %v1260, %v1268
    %v1271 = vtanh.pop %v1270
    %1273 = vrot.lane.b32.xlu0 %v1271, 64
    %v1274 = vpop.permute.xlu0 %1273
    %v1276 = vmul.f32 %v1258, %v1274
    %1278 = vrot.lane.b32.xlu0 %v1167, 64
    %v1279 = vpop.permute.xlu0 %1278
    %v1281 = vsel %vm99, %v1276, %v1279
    %1282 = vmatprep.subr.mxu0 %v54
    %1283 = vmatpush1.msra.mxu0 %v53
    %1284 = vmatprep.subr.mxu0 %v56
    %1285 = vmatpush1.msra.mxu0 %v55
    %1286 = vmatprep.subr.mxu0 %v58
    %1287 = vmatpush1.msra.mxu0 %v57
    %1288 = vmatprep.subr.mxu0 %v60
    %1289 = vmatpush1.msra.mxu0 %v59
    %1290 = vmatprep.subr.mxu0 %v62
    %1291 = vmatpush1.msra.mxu0 %v61
    %1292 = vmatprep.subr.mxu0 %v64
    %1293 = vmatpush1.msra.mxu0 %v63
    %1294 = vmatprep.subr.mxu0 %v66
    %1295 = vmatpush1.msra.mxu0 %v65
    %1296 = vmatprep.subr.mxu0 %v68
    %1297 = vmatpush1.msra.mxu0 %v67
    %1298 = vmatprep.subr.mxu0 %v70
    %1299 = vmatpush1.msra.mxu0 %v69
    %1300 = vmatprep.subr.mxu0 %v72
    %1301 = vmatpush1.msra.mxu0 %v71
    %1302 = vmatprep.subr.mxu0 %v74
    %1303 = vmatpush1.msra.mxu0 %v73
    %1304 = vmatprep.subr.mxu0 %v76
    %1305 = vmatpush1.msra.mxu0 %v75
    %1306 = vmatprep.subr.mxu0 %v78
    %1307 = vmatpush1.msra.mxu0 %v77
    %1308 = vmatprep.subr.mxu0 %v80
    %1309 = vmatpush1.msra.mxu0 %v79
    %1310 = vmatprep.subr.mxu0 %v82
    %1311 = vmatpush1.msra.mxu0 %v81
    %1312 = vmatprep.subr.mxu0 %v84
    %1313 = vmatpush1.msra.mxu0 %v83
    %1314 = vmatprep.subr.mxu0 0.0
    %1315 = vmatpush1.msra.mxu0 0.0
    %1316 = vmatprep.subr.mxu0 0.0
    %1317 = vmatpush1.msra.mxu0 0.0
    %1318 = vmatprep.subr.mxu0 0.0
    %1319 = vmatpush1.msra.mxu0 0.0
    %1320 = vmatprep.subr.mxu0 0.0
    %1321 = vmatpush1.msra.mxu0 0.0
    %1322 = vmatprep.subr.mxu0 0.0
    %1323 = vmatpush1.msra.mxu0 0.0
    %1324 = vmatprep.subr.mxu0 0.0
    %1325 = vmatpush1.msra.mxu0 0.0
    %1326 = vmatprep.subr.mxu0 0.0
    %1327 = vmatpush1.msra.mxu0 0.0
    %1328 = vmatprep.subr.mxu0 0.0
    %1329 = vmatpush1.msra.mxu0 0.0
    %1330 = vmatprep.subr.mxu0 0.0
    %1331 = vmatpush1.msra.mxu0 0.0
    %1332 = vmatprep.subr.mxu0 0.0
    %1333 = vmatpush1.msra.mxu0 0.0
    %1334 = vmatprep.subr.mxu0 0.0
    %1335 = vmatpush1.msra.mxu0 0.0
    %1336 = vmatprep.subr.mxu0 0.0
    %1337 = vmatpush1.msra.mxu0 0.0
    %1338 = vmatprep.subr.mxu0 0.0
    %1339 = vmatpush1.msra.mxu0 0.0
    %1340 = vmatprep.subr.mxu0 0.0
    %1341 = vmatpush1.msra.mxu0 0.0
    %1342 = vmatprep.subr.mxu0 0.0
    %1343 = vmatpush1.msra.mxu0 0.0
    %1344 = vmatprep.subr.mxu0 0.0
    %1345 = vmatpush1.msra.mxu0 0.0
    %1346 = vmatprep.mubr.f32.mxu0 0.0
    %1347 = vmatmul.mubr.f32.gmra.mrb[0].mxu0 %v1281
    %v1348 = vpop.f32.mrb[0].mxu0
    %v1349 = vadd.f32 %v90, %v1348
    %v1350 = vpop.f32.mrb[0].mxu0
    %v1351 = vadd.f32 %v94, %v1350
    %1352 = vdwg.mxu0
    %v1353 = vxor.u32 %v1349, 2147483648
    %v1354 = vxor.u32 %v1351, 2147483648
    %v1355 = vmul.f32 %v1353, 1.442695
    %v1356 = vpow.pop %v1355
    %v1357 = vmul.f32 %v1354, 1.442695
    %v1358 = vpow.pop %v1357
    %v1359 = vadd.f32 %v1356, 1.0
    %v1360 = vadd.f32 %v1358, 1.0
    %v1361 = vrcp.pop %v1359
    %v1362 = vmul.f32 1.0, %v1361
    %v1363 = vrcp.pop %v1360
    %v1364 = vmul.f32 1.0, %v1363
    %v1365 = vtanh.pop %v1351
    %v1366 = vmul.f32 %v1362, %v1161
    %1368 = vrot.lane.b32.xlu0 %v1365, 64
    %v1369 = vpop.permute.xlu0 %1368
    %v1371 = vmul.f32 %v1362, %v1369
    %1373 = vrot.lane.b32.xlu0 %v1371, 64
    %v1374 = vpop.permute.xlu0 %1373
    %v1376 = vadd.f32 %v1366, %v1374
    %v1377 = vtanh.pop %v1376
    %1379 = vrot.lane.b32.xlu0 %v1377, 64
    %v1380 = vpop.permute.xlu0 %1379
    %v1382 = vmul.f32 %v1364, %v1380
    %s1383 = scalar_lea.vmem %s0, 96
    %v1384 = vld [vmem:[%s1383] sm:$0xff]
    %v1385 = vld [vmem:[%s1383 + $0x8] sm:$0xff]
    %v1387 = vsel %vm99, %v1276, 0
    %1389 = vmatprep.subr.mxu0 %v38
    %1390 = vmatpush1.msra.mxu0 %v37
    %1391 = vmatprep.subr.mxu0 %v40
    %1392 = vmatpush1.msra.mxu0 %v39
    %1393 = vmatprep.subr.mxu0 %v42
    %1394 = vmatpush1.msra.mxu0 %v41
    %1395 = vmatprep.subr.mxu0 %v44
    %1396 = vmatpush1.msra.mxu0 %v43
    %1397 = vmatprep.subr.mxu0 %v46
    %1398 = vmatpush1.msra.mxu0 %v45
    %1399 = vmatprep.subr.mxu0 %v48
    %1400 = vmatpush1.msra.mxu0 %v47
    %1401 = vmatprep.subr.mxu0 %v50
    %1402 = vmatpush1.msra.mxu0 %v49
    %1403 = vmatprep.subr.mxu0 %v52
    %1404 = vmatpush1.msra.mxu0 %v51
    %1405 = vmatprep.subr.mxu0 0.0
    %1406 = vmatpush1.msra.mxu0 0.0
    %1407 = vmatprep.subr.mxu0 0.0
    %1408 = vmatpush1.msra.mxu0 0.0
    %1409 = vmatprep.subr.mxu0 0.0
    %1410 = vmatpush1.msra.mxu0 0.0
    %1411 = vmatprep.subr.mxu0 0.0
    %1412 = vmatpush1.msra.mxu0 0.0
    %1413 = vmatprep.subr.mxu0 0.0
    %1414 = vmatpush1.msra.mxu0 0.0
    %1415 = vmatprep.subr.mxu0 0.0
    %1416 = vmatpush1.msra.mxu0 0.0
    %1417 = vmatprep.subr.mxu0 0.0
    %1418 = vmatpush1.msra.mxu0 0.0
    %1419 = vmatprep.subr.mxu0 0.0
    %1420 = vmatpush1.msra.mxu0 0.0
    %1421 = vmatprep.subr.mxu0 0.0
    %1422 = vmatpush1.msra.mxu0 0.0
    %1423 = vmatprep.subr.mxu0 0.0
    %1424 = vmatpush1.msra.mxu0 0.0
    %1425 = vmatprep.subr.mxu0 0.0
    %1426 = vmatpush1.msra.mxu0 0.0
    %1427 = vmatprep.subr.mxu0 0.0
    %1428 = vmatpush1.msra.mxu0 0.0
    %1429 = vmatprep.subr.mxu0 0.0
    %1430 = vmatpush1.msra.mxu0 0.0
    %1431 = vmatprep.subr.mxu0 0.0
    %1432 = vmatpush1.msra.mxu0 0.0
    %1433 = vmatprep.subr.mxu0 0.0
    %1434 = vmatpush1.msra.mxu0 0.0
    %1435 = vmatprep.subr.mxu0 0.0
    %1436 = vmatpush1.msra.mxu0 0.0
    %1437 = vmatprep.subr.mxu0 0.0
    %1438 = vmatpush1.msra.mxu0 0.0
    %1439 = vmatprep.subr.mxu0 0.0
    %1440 = vmatpush1.msra.mxu0 0.0
    %1441 = vmatprep.subr.mxu0 0.0
    %1442 = vmatpush1.msra.mxu0 0.0
    %1443 = vmatprep.subr.mxu0 0.0
    %1444 = vmatpush1.msra.mxu0 0.0
    %1445 = vmatprep.subr.mxu0 0.0
    %1446 = vmatpush1.msra.mxu0 0.0
    %1447 = vmatprep.subr.mxu0 0.0
    %1448 = vmatpush1.msra.mxu0 0.0
    %1449 = vmatprep.subr.mxu0 0.0
    %1450 = vmatpush1.msra.mxu0 0.0
    %1451 = vmatprep.subr.mxu0 0.0
    %1452 = vmatpush1.msra.mxu0 0.0
    %1453 = vmatprep.mubr.f32.mxu0 0.0
    %1454 = vmatmul.mubr.f32.gmra.mrb[0].mxu0 %v1387
    %v1455 = vpop.f32.mrb[0].mxu0
    %v1456 = vadd.f32 0.0, %v1455
    %v1457 = vpop.f32.mrb[0].mxu0
    %v1458 = vadd.f32 0.0, %v1457
    %1459 = vdwg.mxu0
    %v1460 = vadd.f32 %v1384, %v1456
    %v1461 = vadd.f32 %v1385, %v1458
    %v1462 = vxor.u32 %v1460, 2147483648
    %v1463 = vxor.u32 %v1461, 2147483648
    %v1464 = vmul.f32 %v1462, 1.442695
    %v1465 = vpow.pop %v1464
    %v1466 = vmul.f32 %v1463, 1.442695
    %v1467 = vpow.pop %v1466
    %v1468 = vadd.f32 %v1465, 1.0
    %v1469 = vadd.f32 %v1467, 1.0
    %v1470 = vrcp.pop %v1468
    %v1471 = vmul.f32 1.0, %v1470
    %v1472 = vrcp.pop %v1469
    %v1473 = vmul.f32 1.0, %v1472
    %v1474 = vtanh.pop %v1461
    %v1475 = vmul.f32 %v1471, %v1270
    %1477 = vrot.lane.b32.xlu0 %v1474, 64
    %v1478 = vpop.permute.xlu0 %1477
    %v1480 = vmul.f32 %v1471, %v1478
    %1482 = vrot.lane.b32.xlu0 %v1480, 64
    %v1483 = vpop.permute.xlu0 %1482
    %v1485 = vadd.f32 %v1475, %v1483
    %v1486 = vtanh.pop %v1485
    %1488 = vrot.lane.b32.xlu0 %v1486, 64
    %v1489 = vpop.permute.xlu0 %1488
    %v1491 = vmul.f32 %v1473, %v1489
    %1493 = vrot.lane.b32.xlu0 %v1382, 64
    %v1494 = vpop.permute.xlu0 %1493
    %v1496 = vsel %vm99, %v1491, %v1494
    %1497 = vmatprep.subr.mxu0 %v54
    %1498 = vmatpush1.msra.mxu0 %v53
    %1499 = vmatprep.subr.mxu0 %v56
    %1500 = vmatpush1.msra.mxu0 %v55
    %1501 = vmatprep.subr.mxu0 %v58
    %1502 = vmatpush1.msra.mxu0 %v57
    %1503 = vmatprep.subr.mxu0 %v60
    %1504 = vmatpush1.msra.mxu0 %v59
    %1505 = vmatprep.subr.mxu0 %v62
    %1506 = vmatpush1.msra.mxu0 %v61
    %1507 = vmatprep.subr.mxu0 %v64
    %1508 = vmatpush1.msra.mxu0 %v63
    %1509 = vmatprep.subr.mxu0 %v66
    %1510 = vmatpush1.msra.mxu0 %v65
    %1511 = vmatprep.subr.mxu0 %v68
    %1512 = vmatpush1.msra.mxu0 %v67
    %1513 = vmatprep.subr.mxu0 %v70
    %1514 = vmatpush1.msra.mxu0 %v69
    %1515 = vmatprep.subr.mxu0 %v72
    %1516 = vmatpush1.msra.mxu0 %v71
    %1517 = vmatprep.subr.mxu0 %v74
    %1518 = vmatpush1.msra.mxu0 %v73
    %1519 = vmatprep.subr.mxu0 %v76
    %1520 = vmatpush1.msra.mxu0 %v75
    %1521 = vmatprep.subr.mxu0 %v78
    %1522 = vmatpush1.msra.mxu0 %v77
    %1523 = vmatprep.subr.mxu0 %v80
    %1524 = vmatpush1.msra.mxu0 %v79
    %1525 = vmatprep.subr.mxu0 %v82
    %1526 = vmatpush1.msra.mxu0 %v81
    %1527 = vmatprep.subr.mxu0 %v84
    %1528 = vmatpush1.msra.mxu0 %v83
    %1529 = vmatprep.subr.mxu0 0.0
    %1530 = vmatpush1.msra.mxu0 0.0
    %1531 = vmatprep.subr.mxu0 0.0
    %1532 = vmatpush1.msra.mxu0 0.0
    %1533 = vmatprep.subr.mxu0 0.0
    %1534 = vmatpush1.msra.mxu0 0.0
    %1535 = vmatprep.subr.mxu0 0.0
    %1536 = vmatpush1.msra.mxu0 0.0
    %1537 = vmatprep.subr.mxu0 0.0
    %1538 = vmatpush1.msra.mxu0 0.0
    %1539 = vmatprep.subr.mxu0 0.0
    %1540 = vmatpush1.msra.mxu0 0.0
    %1541 = vmatprep.subr.mxu0 0.0
    %1542 = vmatpush1.msra.mxu0 0.0
    %1543 = vmatprep.subr.mxu0 0.0
    %1544 = vmatpush1.msra.mxu0 0.0
    %1545 = vmatprep.subr.mxu0 0.0
    %1546 = vmatpush1.msra.mxu0 0.0
    %1547 = vmatprep.subr.mxu0 0.0
    %1548 = vmatpush1.msra.mxu0 0.0
    %1549 = vmatprep.subr.mxu0 0.0
    %1550 = vmatpush1.msra.mxu0 0.0
    %1551 = vmatprep.subr.mxu0 0.0
    %1552 = vmatpush1.msra.mxu0 0.0
    %1553 = vmatprep.subr.mxu0 0.0
    %1554 = vmatpush1.msra.mxu0 0.0
    %1555 = vmatprep.subr.mxu0 0.0
    %1556 = vmatpush1.msra.mxu0 0.0
    %1557 = vmatprep.subr.mxu0 0.0
    %1558 = vmatpush1.msra.mxu0 0.0
    %1559 = vmatprep.subr.mxu0 0.0
    %1560 = vmatpush1.msra.mxu0 0.0
    %1561 = vmatprep.mubr.f32.mxu0 0.0
    %1562 = vmatmul.mubr.f32.gmra.mrb[0].mxu0 %v1496
    %v1563 = vpop.f32.mrb[0].mxu0
    %v1564 = vadd.f32 %v90, %v1563
    %v1565 = vpop.f32.mrb[0].mxu0
    %v1566 = vadd.f32 %v94, %v1565
    %1567 = vdwg.mxu0
    %v1568 = vxor.u32 %v1564, 2147483648
    %v1569 = vxor.u32 %v1566, 2147483648
    %v1570 = vmul.f32 %v1568, 1.442695
    %v1571 = vpow.pop %v1570
    %v1572 = vmul.f32 %v1569, 1.442695
    %v1573 = vpow.pop %v1572
    %v1574 = vadd.f32 %v1571, 1.0
    %v1575 = vadd.f32 %v1573, 1.0
    %v1576 = vrcp.pop %v1574
    %v1577 = vmul.f32 1.0, %v1576
    %v1578 = vrcp.pop %v1575
    %v1579 = vmul.f32 1.0, %v1578
    %v1580 = vtanh.pop %v1566
    %v1581 = vmul.f32 %v1577, %v1376
    %1583 = vrot.lane.b32.xlu0 %v1580, 64
    %v1584 = vpop.permute.xlu0 %1583
    %v1586 = vmul.f32 %v1577, %v1584
    %1588 = vrot.lane.b32.xlu0 %v1586, 64
    %v1589 = vpop.permute.xlu0 %1588
    %v1591 = vadd.f32 %v1581, %v1589
    %v1592 = vtanh.pop %v1591
    %1594 = vrot.lane.b32.xlu0 %v1592, 64
    %v1595 = vpop.permute.xlu0 %1594
    %v1597 = vmul.f32 %v1579, %v1595
    %s1598 = scalar_lea.vmem %s0, 112
    %v1599 = vld [vmem:[%s1598] sm:$0xff]
    %v1600 = vld [vmem:[%s1598 + $0x8] sm:$0xff]
    %v1602 = vsel %vm99, %v1491, 0
    %1604 = vmatprep.subr.mxu0 %v38
    %1605 = vmatpush1.msra.mxu0 %v37
    %1606 = vmatprep.subr.mxu0 %v40
    %1607 = vmatpush1.msra.mxu0 %v39
    %1608 = vmatprep.subr.mxu0 %v42
    %1609 = vmatpush1.msra.mxu0 %v41
    %1610 = vmatprep.subr.mxu0 %v44
    %1611 = vmatpush1.msra.mxu0 %v43
    %1612 = vmatprep.subr.mxu0 %v46
    %1613 = vmatpush1.msra.mxu0 %v45
    %1614 = vmatprep.subr.mxu0 %v48
    %1615 = vmatpush1.msra.mxu0 %v47
    %1616 = vmatprep.subr.mxu0 %v50
    %1617 = vmatpush1.msra.mxu0 %v49
    %1618 = vmatprep.subr.mxu0 %v52
    %1619 = vmatpush1.msra.mxu0 %v51
    %1620 = vmatprep.subr.mxu0 0.0
    %1621 = vmatpush1.msra.mxu0 0.0
    %1622 = vmatprep.subr.mxu0 0.0
    %1623 = vmatpush1.msra.mxu0 0.0
    %1624 = vmatprep.subr.mxu0 0.0
    %1625 = vmatpush1.msra.mxu0 0.0
    %1626 = vmatprep.subr.mxu0 0.0
    %1627 = vmatpush1.msra.mxu0 0.0
    %1628 = vmatprep.subr.mxu0 0.0
    %1629 = vmatpush1.msra.mxu0 0.0
    %1630 = vmatprep.subr.mxu0 0.0
    %1631 = vmatpush1.msra.mxu0 0.0
    %1632 = vmatprep.subr.mxu0 0.0
    %1633 = vmatpush1.msra.mxu0 0.0
    %1634 = vmatprep.subr.mxu0 0.0
    %1635 = vmatpush1.msra.mxu0 0.0
    %1636 = vmatprep.subr.mxu0 0.0
    %1637 = vmatpush1.msra.mxu0 0.0
    %1638 = vmatprep.subr.mxu0 0.0
    %1639 = vmatpush1.msra.mxu0 0.0
    %1640 = vmatprep.subr.mxu0 0.0
    %1641 = vmatpush1.msra.mxu0 0.0
    %1642 = vmatprep.subr.mxu0 0.0
    %1643 = vmatpush1.msra.mxu0 0.0
    %1644 = vmatprep.subr.mxu0 0.0
    %1645 = vmatpush1.msra.mxu0 0.0
    %1646 = vmatprep.subr.mxu0 0.0
    %1647 = vmatpush1.msra.mxu0 0.0
    %1648 = vmatprep.subr.mxu0 0.0
    %1649 = vmatpush1.msra.mxu0 0.0
    %1650 = vmatprep.subr.mxu0 0.0
    %1651 = vmatpush1.msra.mxu0 0.0
    %1652 = vmatprep.subr.mxu0 0.0
    %1653 = vmatpush1.msra.mxu0 0.0
    %1654 = vmatprep.subr.mxu0 0.0
    %1655 = vmatpush1.msra.mxu0 0.0
    %1656 = vmatprep.subr.mxu0 0.0
    %1657 = vmatpush1.msra.mxu0 0.0
    %1658 = vmatprep.subr.mxu0 0.0
    %1659 = vmatpush1.msra.mxu0 0.0
    %1660 = vmatprep.subr.mxu0 0.0
    %1661 = vmatpush1.msra.mxu0 0.0
    %1662 = vmatprep.subr.mxu0 0.0
    %1663 = vmatpush1.msra.mxu0 0.0
    %1664 = vmatprep.subr.mxu0 0.0
    %1665 = vmatpush1.msra.mxu0 0.0
    %1666 = vmatprep.subr.mxu0 0.0
    %1667 = vmatpush1.msra.mxu0 0.0
    %1668 = vmatprep.mubr.f32.mxu0 0.0
    %1669 = vmatmul.mubr.f32.gmra.mrb[0].mxu0 %v1602
    %v1670 = vpop.f32.mrb[0].mxu0
    %v1671 = vadd.f32 0.0, %v1670
    %v1672 = vpop.f32.mrb[0].mxu0
    %v1673 = vadd.f32 0.0, %v1672
    %1674 = vdwg.mxu0
    %v1675 = vadd.f32 %v1599, %v1671
    %v1676 = vadd.f32 %v1600, %v1673
    %v1677 = vxor.u32 %v1675, 2147483648
    %v1678 = vxor.u32 %v1676, 2147483648
    %v1679 = vmul.f32 %v1677, 1.442695
    %v1680 = vpow.pop %v1679
    %v1681 = vmul.f32 %v1678, 1.442695
    %v1682 = vpow.pop %v1681
    %v1683 = vadd.f32 %v1680, 1.0
    %v1684 = vadd.f32 %v1682, 1.0
    %v1685 = vrcp.pop %v1683
    %v1686 = vmul.f32 1.0, %v1685
    %v1687 = vrcp.pop %v1684
    %v1688 = vmul.f32 1.0, %v1687
    %v1689 = vtanh.pop %v1676
    %v1690 = vmul.f32 %v1686, %v1485
    %1692 = vrot.lane.b32.xlu0 %v1689, 64
    %v1693 = vpop.permute.xlu0 %1692
    %v1695 = vmul.f32 %v1686, %v1693
    %1697 = vrot.lane.b32.xlu0 %v1695, 64
    %v1698 = vpop.permute.xlu0 %1697
    %v1700 = vadd.f32 %v1690, %v1698
    %v1701 = vtanh.pop %v1700
    %1703 = vrot.lane.b32.xlu0 %v1701, 64
    %v1704 = vpop.permute.xlu0 %1703
    %v1706 = vmul.f32 %v1688, %v1704
    %1708 = vrot.lane.b32.xlu0 %v1597, 64
    %v1709 = vpop.permute.xlu0 %1708
    %v1711 = vsel %vm99, %v1706, %v1709
    %1712 = vmatprep.subr.mxu0 %v54
    %1713 = vmatpush1.msra.mxu0 %v53
    %1714 = vmatprep.subr.mxu0 %v56
    %1715 = vmatpush1.msra.mxu0 %v55
    %1716 = vmatprep.subr.mxu0 %v58
    %1717 = vmatpush1.msra.mxu0 %v57
    %1718 = vmatprep.subr.mxu0 %v60
    %1719 = vmatpush1.msra.mxu0 %v59
    %1720 = vmatprep.subr.mxu0 %v62
    %1721 = vmatpush1.msra.mxu0 %v61
    %1722 = vmatprep.subr.mxu0 %v64
    %1723 = vmatpush1.msra.mxu0 %v63
    %1724 = vmatprep.subr.mxu0 %v66
    %1725 = vmatpush1.msra.mxu0 %v65
    %1726 = vmatprep.subr.mxu0 %v68
    %1727 = vmatpush1.msra.mxu0 %v67
    %1728 = vmatprep.subr.mxu0 %v70
    %1729 = vmatpush1.msra.mxu0 %v69
    %1730 = vmatprep.subr.mxu0 %v72
    %1731 = vmatpush1.msra.mxu0 %v71
    %1732 = vmatprep.subr.mxu0 %v74
    %1733 = vmatpush1.msra.mxu0 %v73
    %1734 = vmatprep.subr.mxu0 %v76
    %1735 = vmatpush1.msra.mxu0 %v75
    %1736 = vmatprep.subr.mxu0 %v78
    %1737 = vmatpush1.msra.mxu0 %v77
    %1738 = vmatprep.subr.mxu0 %v80
    %1739 = vmatpush1.msra.mxu0 %v79
    %1740 = vmatprep.subr.mxu0 %v82
    %1741 = vmatpush1.msra.mxu0 %v81
    %1742 = vmatprep.subr.mxu0 %v84
    %1743 = vmatpush1.msra.mxu0 %v83
    %1744 = vmatprep.subr.mxu0 0.0
    %1745 = vmatpush1.msra.mxu0 0.0
    %1746 = vmatprep.subr.mxu0 0.0
    %1747 = vmatpush1.msra.mxu0 0.0
    %1748 = vmatprep.subr.mxu0 0.0
    %1749 = vmatpush1.msra.mxu0 0.0
    %1750 = vmatprep.subr.mxu0 0.0
    %1751 = vmatpush1.msra.mxu0 0.0
    %1752 = vmatprep.subr.mxu0 0.0
    %1753 = vmatpush1.msra.mxu0 0.0
    %1754 = vmatprep.subr.mxu0 0.0
    %1755 = vmatpush1.msra.mxu0 0.0
    %1756 = vmatprep.subr.mxu0 0.0
    %1757 = vmatpush1.msra.mxu0 0.0
    %1758 = vmatprep.subr.mxu0 0.0
    %1759 = vmatpush1.msra.mxu0 0.0
    %1760 = vmatprep.subr.mxu0 0.0
    %1761 = vmatpush1.msra.mxu0 0.0
    %1762 = vmatprep.subr.mxu0 0.0
    %1763 = vmatpush1.msra.mxu0 0.0
    %1764 = vmatprep.subr.mxu0 0.0
    %1765 = vmatpush1.msra.mxu0 0.0
    %1766 = vmatprep.subr.mxu0 0.0
    %1767 = vmatpush1.msra.mxu0 0.0
    %1768 = vmatprep.subr.mxu0 0.0
    %1769 = vmatpush1.msra.mxu0 0.0
    %1770 = vmatprep.subr.mxu0 0.0
    %1771 = vmatpush1.msra.mxu0 0.0
    %1772 = vmatprep.subr.mxu0 0.0
    %1773 = vmatpush1.msra.mxu0 0.0
    %1774 = vmatprep.subr.mxu0 0.0
    %1775 = vmatpush1.msra.mxu0 0.0
    %1776 = vmatprep.mubr.f32.mxu0 0.0
    %1777 = vmatmul.mubr.f32.gmra.mrb[0].mxu0 %v1711
    %v1778 = vpop.f32.mrb[0].mxu0
    %v1779 = vadd.f32 %v90, %v1778
    %v1780 = vpop.f32.mrb[0].mxu0
    %v1781 = vadd.f32 %v94, %v1780
    %1782 = vdwg.mxu0
    %v1783 = vxor.u32 %v1779, 2147483648
    %v1784 = vxor.u32 %v1781, 2147483648
    %v1785 = vmul.f32 %v1783, 1.442695
    %v1786 = vpow.pop %v1785
    %v1787 = vmul.f32 %v1784, 1.442695
    %v1788 = vpow.pop %v1787
    %v1789 = vadd.f32 %v1786, 1.0
    %v1790 = vadd.f32 %v1788, 1.0
    %v1791 = vrcp.pop %v1789
    %v1792 = vmul.f32 1.0, %v1791
    %v1793 = vrcp.pop %v1790
    %v1794 = vmul.f32 1.0, %v1793
    %v1795 = vtanh.pop %v1781
    %v1796 = vmul.f32 %v1792, %v1591
    %1798 = vrot.lane.b32.xlu0 %v1795, 64
    %v1799 = vpop.permute.xlu0 %1798
    %v1801 = vmul.f32 %v1792, %v1799
    %1803 = vrot.lane.b32.xlu0 %v1801, 64
    %v1804 = vpop.permute.xlu0 %1803
    %v1806 = vadd.f32 %v1796, %v1804
    %v1807 = vtanh.pop %v1806
    %1809 = vrot.lane.b32.xlu0 %v1807, 64
    %v1810 = vpop.permute.xlu0 %1809
    %v1812 = vmul.f32 %v1794, %v1810
    %v1813 = vld [vmem:[%s4] sm:$0xff]
    %v1814 = vld [vmem:[%s4 + $0x8] sm:$0xff]
    %v1815 = vld [vmem:[%s4 + $0x10] sm:$0xff]
    %v1816 = vld [vmem:[%s4 + $0x18] sm:$0xff]
    %v1817 = vld [vmem:[%s4 + $0x20] sm:$0xff]
    %v1818 = vld [vmem:[%s4 + $0x28] sm:$0xff]
    %v1819 = vld [vmem:[%s4 + $0x30] sm:$0xff]
    %v1820 = vld [vmem:[%s4 + $0x38] sm:$0xff]
    %v1821 = vld [vmem:[%s5] sm:$0x1]
    %v1823 = vlaneseq
    %v1824 = vshrl.u32 %v1823, 7
    %v1825 = vsub.s32 0, %v1824
    %v1826 = vrot.slane %v1821, %v1825
    %v1829 = vsel %vm99, %v1812, 0
    %1831 = vmatprep.subr.mxu0 0.0
    %1832 = vmatpush1.msra.mxu0 %v1813
    %1833 = vmatprep.subr.mxu0 0.0
    %1834 = vmatpush1.msra.mxu0 %v1814
    %1835 = vmatprep.subr.mxu0 0.0
    %1836 = vmatpush1.msra.mxu0 %v1815
    %1837 = vmatprep.subr.mxu0 0.0
    %1838 = vmatpush1.msra.mxu0 %v1816
    %1839 = vmatprep.subr.mxu0 0.0
    %1840 = vmatpush1.msra.mxu0 %v1817
    %1841 = vmatprep.subr.mxu0 0.0
    %1842 = vmatpush1.msra.mxu0 %v1818
    %1843 = vmatprep.subr.mxu0 0.0
    %1844 = vmatpush1.msra.mxu0 %v1819
    %1845 = vmatprep.subr.mxu0 0.0
    %1846 = vmatpush1.msra.mxu0 %v1820
    %1847 = vmatprep.subr.mxu0 0.0
    %1848 = vmatpush1.msra.mxu0 0.0
    %1849 = vmatprep.subr.mxu0 0.0
    %1850 = vmatpush1.msra.mxu0 0.0
    %1851 = vmatprep.subr.mxu0 0.0
    %1852 = vmatpush1.msra.mxu0 0.0
    %1853 = vmatprep.subr.mxu0 0.0
    %1854 = vmatpush1.msra.mxu0 0.0
    %1855 = vmatprep.subr.mxu0 0.0
    %1856 = vmatpush1.msra.mxu0 0.0
    %1857 = vmatprep.subr.mxu0 0.0
    %1858 = vmatpush1.msra.mxu0 0.0
    %1859 = vmatprep.subr.mxu0 0.0
    %1860 = vmatpush1.msra.mxu0 0.0
    %1861 = vmatprep.subr.mxu0 0.0
    %1862 = vmatpush1.msra.mxu0 0.0
    %1863 = vmatprep.subr.mxu0 0.0
    %1864 = vmatpush1.msra.mxu0 0.0
    %1865 = vmatprep.subr.mxu0 0.0
    %1866 = vmatpush1.msra.mxu0 0.0
    %1867 = vmatprep.subr.mxu0 0.0
    %1868 = vmatpush1.msra.mxu0 0.0
    %1869 = vmatprep.subr.mxu0 0.0
    %1870 = vmatpush1.msra.mxu0 0.0
    %1871 = vmatprep.subr.mxu0 0.0
    %1872 = vmatpush1.msra.mxu0 0.0
    %1873 = vmatprep.subr.mxu0 0.0
    %1874 = vmatpush1.msra.mxu0 0.0
    %1875 = vmatprep.subr.mxu0 0.0
    %1876 = vmatpush1.msra.mxu0 0.0
    %1877 = vmatprep.subr.mxu0 0.0
    %1878 = vmatpush1.msra.mxu0 0.0
    %1879 = vmatprep.subr.mxu0 0.0
    %1880 = vmatpush1.msra.mxu0 0.0
    %1881 = vmatprep.subr.mxu0 0.0
    %1882 = vmatpush1.msra.mxu0 0.0
    %1883 = vmatprep.subr.mxu0 0.0
    %1884 = vmatpush1.msra.mxu0 0.0
    %1885 = vmatprep.subr.mxu0 0.0
    %1886 = vmatpush1.msra.mxu0 0.0
    %1887 = vmatprep.subr.mxu0 0.0
    %1888 = vmatpush1.msra.mxu0 0.0
    %1889 = vmatprep.subr.mxu0 0.0
    %1890 = vmatpush1.msra.mxu0 0.0
    %1891 = vmatprep.subr.mxu0 0.0
    %1892 = vmatpush1.msra.mxu0 0.0
    %1893 = vmatprep.subr.mxu0 0.0
    %1894 = vmatpush1.msra.mxu0 0.0
    %1895 = vmatprep.mubr.f32.mxu0 0.0
    %1896 = vmatmul.mubr.f32.gmra.mrb[0].mxu0 %v1829
    %v1897 = vpop.f32.mrb[0].mxu0
    %v1898 = vadd.f32 %v1826, %v1897
    %v1899 = vpop.f32.mrb[0].mxu0
    %1900 = vdwg.mxu0
    %1901 = vst [vmem:[%s6] sm:$0xff] %v1898
    // Predicated region
    $region30: #{rnn_forward.1} parent=1 // pred_check
      _
    $region31: #{rnn_forward.1} parent=1 // pred_check_branch
      %1903 = sbr.rel (0) target = $region33
    $region32: #{rnn_forward.1} parent=1 // pred_region
      _
    $region33: #{rnn_forward.1} parent=1 // pred_fallthru
      _
    // Predicated region
    $region34: #{rnn_forward.1} parent=1 // pred_check
      _
    $region35: #{rnn_forward.1} parent=1 // pred_check_branch
      %1905 = sbr.rel (0) target = $region37
    $region36: #{rnn_forward.1} parent=1 // pred_region
      _
    $region37: #{rnn_forward.1} parent=1 // pred_fallthru
      _
    %1906 = vsyncpa [#allocation3], 1

</llo_original>
